<compile_context>
chip_gen: v7x
topology: tpu7x:2x2x1
jax: 0.10.0
libtpu: 0.0.40
codegen_flags: <defaults>
</compile_context>

<pallas_src>
import math

import jax
import jax.numpy as jnp
from jax import lax
from jax.experimental import pallas as pl
from jax.experimental.pallas import tpu as pltpu


def _round_up(x, m):
    return ((x + m - 1) // m) * m


def _cdiv(a, b):
    return -(-a // b)


def _pad(x, target_shape):
    pads = [(0, t - s) for s, t in zip(x.shape, target_shape)]
    if any(p for _, p in pads):
        x = jnp.pad(x, pads)
    return x


def _tpu_vmem_and_cores():
    """Best-effort (VMEM capacity bytes, TensorCores per chip); safe defaults on failure."""
    vmem_cap = 128 * 1024 * 1024          # v5e / v6e physical per-TC VMEM
    num_cores = 1
    try:
        info = pltpu.get_tpu_info()
        vmem_cap = int(getattr(info, "vmem_capacity_bytes", vmem_cap))
    except Exception:
        pass
    try:
        kind = jax.devices()[0].device_kind.lower()
    except Exception:
        kind = ""
    # v7x is the only 2-TensorCore chip, and the only one with 64 MiB VMEM per TC.
    if "7" in kind or vmem_cap <= 64 * 1024 * 1024:
        num_cores = 2
    return vmem_cap, num_cores


def _attention_pooling_kernel(hs_ref, q_ref, amask_ref,
                              wq_ref, bq_ref, wk_ref, bk_ref, wv_ref, bv_ref,
                              o_ref):
    bt, s_k, h = hs_ref.shape
    _, s_q, _ = q_ref.shape
    cdt = wq_ref.dtype                        # MXU operand dtype (bf16 or f32)
    approx_recip = jnp.dtype(cdt) != jnp.dtype(jnp.float32)

    # Inputs arrive in their source dtype (no wrapper-side cast pass over HBM);
    # cast once in VMEM, flattened so the projections are big MXU matmuls.
    hs2 = hs_ref[...].reshape(bt * s_k, h).astype(cdt)
    q2 = q_ref[...].reshape(bt * s_q, h).astype(cdt)

    # Projections: weights pre-transposed, 1/sqrt(H) folded into Wq/bq in the wrapper.
    # Cast to cdt immediately after the f32 bias add so no f32 q/k/v stays live.
    q = (jnp.dot(q2, wq_ref[...], preferred_element_type=jnp.float32)
         + bq_ref[...]).astype(cdt).reshape(bt, s_q, h)
    k = (jnp.dot(hs2, wk_ref[...], preferred_element_type=jnp.float32)
         + bk_ref[...]).astype(cdt).reshape(bt, s_k, h)
    v = (jnp.dot(hs2, wv_ref[...], preferred_element_type=jnp.float32)
         + bv_ref[...]).astype(cdt).reshape(bt, s_k, h)

    # scores = q @ k^T per batch, contracting the last dim (no explicit K transpose).
    scores = lax.dot_general(q, k, (((2,), (2,)), ((0,), (0,))),
                             preferred_element_type=jnp.float32)
    scores = scores + amask_ref[...]          # additive mask precomputed in wrapper, (bt,1,S_k)

    # softmax over keys in f32 (v5e has no bf16 VPU/EUP); EUP reciprocal on the bf16 path.
    m = jnp.max(scores, axis=-1, keepdims=True)
    e = jnp.exp(scores - m)
    denom = jnp.sum(e, axis=-1, keepdims=True)
    probs = e * pl.reciprocal(denom, approx=approx_recip)

    # dropout: identity (eval mode)
    # TODO(synk): training-mode dropout on attention probs (pltpu.prng_random_bits).

    # context = probs @ v per batch -> (bt, S_q, H)
    ctx = lax.dot_general(probs.astype(cdt), v, (((2,), (1,)), ((0,), (0,))),
                          preferred_element_type=jnp.float32)
    o_ref[...] = ctx.astype(o_ref.dtype)


def attention_pooling(hidden_states, queries, params, attention_mask=None, *,
                      compute_dtype=jnp.bfloat16, out_dtype=None, block_b=None,
                      weight_buffering="auto"):
    """Pallas-backed AttentionPooling forward.

    hidden_states: (B, S_k, H), queries: (B, S_q, H), attention_mask: (B, S_k) or None,
    params: dict of wq,bq,wk,bk,wv,bv in nn.Linear layout.
    compute_dtype: MXU operand dtype (bf16 on v5e/v6e/v7x; softmax/bias math stays f32).
    out_dtype: output dtype (default: input dtype; pass bf16 to halve writeback).
    weight_buffering: "auto" (try single-buffered weights, fall back), "single", "double".
      Under jit, prefer "double" or "single" so the eager fallback path is not used.
    """
    B, S_k, H = hidden_states.shape
    _, S_q, _ = queries.shape
    if attention_mask is None:
        attention_mask = jnp.ones((B, S_k), dtype=jnp.float32)
    attention_mask = attention_mask.astype(jnp.float32)

    cdt = jnp.dtype(compute_dtype)
    in_dt = jnp.dtype(hidden_states.dtype)
    out_dt = jnp.dtype(out_dtype) if out_dtype is not None else in_dt
    c_it, in_it, out_it = cdt.itemsize, in_dt.itemsize, out_dt.itemsize

    sublane = 8 * max(1, 4 // c_it)           # 8 for f32, 16 for bf16 (sublane packing)
    Hp = _round_up(H, 128)                    # lane-dense feature dim (unmasked stores)
    Sqp = _round_up(S_q, sublane)
    Skp = _round_up(S_k, sublane)

    vmem_cap, num_cores = _tpu_vmem_and_cores()

    # --- tile sizing from a per-generation VMEM budget (not an MXU-row heuristic) -----
    # Conservative per-grid-step footprint estimate.  Weights are assumed double-buffered
    # (the single-buffered path only adds slack).
    w_bytes = 2 * (3 * Hp * Hp * c_it + 3 * Hp * 4)
    per_batch = (
        2 * (Skp * Hp * in_it + Sqp * Hp * in_it + Skp * 4)   # pipelined input blocks (2 bufs)
        + 2 * Sqp * Hp * out_it                               # pipelined output block (2 bufs)
        + (Sqp + Skp) * Hp * c_it                             # casted hs2 / q2
        + (Sqp + 2 * Skp) * Hp * (c_it + 4)                   # q/k/v in cdt + transient f32
        + 2 * Sqp * Skp * 4                                   # scores + probs (f32)
        + Sqp * Hp * 4)                                       # ctx accumulator (f32)
    budget = int(0.45 * vmem_cap)             # ~56 MiB on v5e/v6e, ~28 MiB on v7x
    if block_b is None:
        block_b = int(max(1, min(B, (budget - w_bytes) // max(1, per_batch))))

    n_steps = _cdiv(B, block_b)
    # Megacore: only v7x (2 TCs) wants >= 2 grid steps, and an even count so both cores
    # get equal work.  Single-TC chips (v5e/v6e) keep the largest block / fewest steps.
    if num_cores >= 2 and B >= 2:
        n_steps = max(n_steps, 2)
        if n_steps % 2:
            n_steps += 1
    block_b = _cdiv(B, n_steps)
    Bp = n_steps * block_b

    footprint = w_bytes + block_b * per_batch
    vmem_limit_bytes = int(min(int(0.9 * vmem_cap),
                               max(32 * 1024 * 1024, 2 * footprint)))

    scale = 1.0 / math.sqrt(H)

    # Pre-transpose weights (x @ W.T -> x @ Wt), fold 1/sqrt(H) into the query projection,
    # pad to lane/sublane-dense shapes.  hidden_states / queries are NOT cast here — the
    # cast happens in-kernel (saves one full HBM read+write pass); their pads are no-ops
    # when shapes are already aligned.
    wq_t = _pad(params["wq"].T * scale, (Hp, Hp)).astype(cdt)
    wk_t = _pad(params["wk"].T, (Hp, Hp)).astype(cdt)
    wv_t = _pad(params["wv"].T, (Hp, Hp)).astype(cdt)
    bq = _pad((params["bq"] * scale).reshape(1, H).astype(jnp.float32), (1, Hp))
    bk = _pad(params["bk"].reshape(1, H).astype(jnp.float32), (1, Hp))
    bv = _pad(params["bv"].reshape(1, H).astype(jnp.float32), (1, Hp))

    hs = _pad(hidden_states, (Bp, Skp, Hp))
    qs = _pad(queries, (Bp, Sqp, Hp))
    amask = _pad(attention_mask, (Bp, Skp))                 # padded keys -> mask value 0
    amask = ((1.0 - amask) * -10000.0).reshape(Bp, 1, Skp)  # additive mask, precomputed

    # Advisory cost estimate for the XLA scheduler.
    flops = 2 * Bp * (Sqp * Hp * Hp + 2 * Skp * Hp * Hp + 2 * Sqp * Skp * Hp)
    transcendentals = Bp * Sqp * Skp
    bytes_accessed = int(Bp * Skp * Hp * in_it + Bp * Sqp * Hp * in_it + Bp * Skp * 4
                         + 3 * Hp * Hp * c_it + 3 * Hp * 4
                         + Bp * Sqp * Hp * out_it)

    def build(weight_mode):
        if weight_mode is None:
            wspec = lambda shape: pl.BlockSpec(shape, lambda b: (0, 0))
        else:
            wspec = lambda shape: pl.BlockSpec(shape, lambda b: (0, 0),
                                               pipeline_mode=weight_mode)
        return pl.pallas_call(
            _attention_pooling_kernel,
            out_shape=jax.ShapeDtypeStruct((Bp, Sqp, Hp), out_dt),
            grid_spec=pltpu.PrefetchScalarGridSpec(
                num_scalar_prefetch=0,
                grid=(n_steps,),
                in_specs=[
                    pl.BlockSpec((block_b, Skp, Hp), lambda b: (b, 0, 0)),  # hidden_states
                    pl.BlockSpec((block_b, Sqp, Hp), lambda b: (b, 0, 0)),  # queries
                    pl.BlockSpec((block_b, 1, Skp), lambda b: (b, 0, 0)),   # additive mask
                    wspec((Hp, Hp)), wspec((1, Hp)),                        # wq_t, bq
                    wspec((Hp, Hp)), wspec((1, Hp)),                        # wk_t, bk
                    wspec((Hp, Hp)), wspec((1, Hp)),                        # wv_t, bv
                ],
                out_specs=pl.BlockSpec((block_b, Sqp, Hp), lambda b: (b, 0, 0)),
            ),
            compiler_params=pltpu.CompilerParams(
                dimension_semantics=("parallel",),
                vmem_limit_bytes=vmem_limit_bytes),
            cost_estimate=pl.CostEstimate(
                flops=flops, transcendentals=transcendentals,
                bytes_accessed=bytes_accessed),
        )

    operands = (hs, qs, amask, wq_t, bq, wk_t, bk, wv_t, bv)

    attempts = []
    if weight_buffering in ("auto", "single"):
        attempts.append("single")
    if weight_buffering in ("auto", "double"):
        attempts.append("double")

    out = None
    for i, attempt in enumerate(attempts):
        try:
            mode = pl.Buffered(1) if attempt == "single" else None
            out = build(mode)(*operands)
            if attempt == "single" and len(attempts) > 1:
                # Surface any lowering/compile issue of the single-buffered weight path
                # here so the double-buffered fallback can take over (eager mode).
                out = jax.block_until_ready(out)
            break
        except Exception:
            if i == len(attempts) - 1:
                raise
            out = None

    return out[:B, :S_q, :H]


def _reference(hidden_states, queries, params, attention_mask=None):
    B, S_k, H = hidden_states.shape
    if attention_mask is None:
        attention_mask = jnp.ones((B, S_k), dtype=jnp.float32)
    mask = (1.0 - attention_mask.astype(jnp.float32))[:, None, :] * -10000.0
    q = queries @ params["wq"].T + params["bq"]
    k = hidden_states @ params["wk"].T + params["bk"]
    v = hidden_states @ params["wv"].T + params["bv"]
    scores = jnp.einsum("bqh,bkh->bqk", q, k) / math.sqrt(H) + mask
    probs = jax.nn.softmax(scores, axis=-1)
    return jnp.einsum("bqk,bkh->bqh", probs, v)


def init_params(key, hidden_size):
    # Deterministic init mimicking nn.Linear default (uniform +/- 1/sqrt(H)).
    bound = 1.0 / math.sqrt(hidden_size)
    ks = jax.random.split(key, 6)
    u = lambda k, shape: jax.random.uniform(k, shape, jnp.float32, -bound, bound)
    return {
        "wq": u(ks[0], (hidden_size, hidden_size)), "bq": u(ks[1], (hidden_size,)),
        "wk": u(ks[2], (hidden_size, hidden_size)), "bk": u(ks[3], (hidden_size,)),
        "wv": u(ks[4], (hidden_size, hidden_size)), "bv": u(ks[5], (hidden_size,)),
    }


if __name__ == "__main__":
    B, S_q, S_k, H = 2, 8, 16, 32
    key = jax.random.PRNGKey(0)
    k_hs, k_q, k_m, k_p = jax.random.split(key, 4)

    hidden_states = jax.random.normal(k_hs, (B, S_k, H), jnp.float32)
    queries = jax.random.normal(k_q, (B, S_q, H), jnp.float32)
    # A mask with some masked-out positions (0 = masked).
    attention_mask = (jax.random.uniform(k_m, (B, S_k)) > 0.25).astype(jnp.float32)
    params = init_params(k_p, H)

    ref = _reference(hidden_states, queries, params, attention_mask)

    # Exact-semantics check: f32 operand path matches the module at tight tolerance.
    out_f32 = attention_pooling(hidden_states, queries, params, attention_mask,
                                compute_dtype=jnp.float32)
    out_f32 = jax.block_until_ready(out_f32)
    assert out_f32.shape == (B, S_q, H)
    assert jnp.allclose(out_f32, ref, atol=1e-4, rtol=1e-4), "f32 path mismatch vs reference"

    # Fast path (bf16 MXU operands, f32 accumulation/softmax) — looser tolerance.
    out_bf16 = attention_pooling(hidden_states, queries, params, attention_mask,
                                 compute_dtype=jnp.bfloat16)
    out_bf16 = jax.block_until_ready(out_bf16)
    assert out_bf16.shape == (B, S_q, H)
    assert jnp.allclose(out_bf16, ref, atol=5e-2, rtol=5e-2), "bf16 path mismatch vs reference"

    print("KERNEL_OK")
</pallas_src>

<mosaic_0001>
module attributes {stable_mosaic.version = 11 : i64} {
  func.func @_attention_pooling_kernel(%arg0: i32, %arg1: memref<2x16x128xf32, #tpu.memory_space<vmem>>, %arg2: memref<2x8x128xf32, #tpu.memory_space<vmem>>, %arg3: memref<2x1x16xf32, #tpu.memory_space<vmem>>, %arg4: memref<128x128xf32, #tpu.memory_space<vmem>>, %arg5: memref<1x128xf32, #tpu.memory_space<vmem>>, %arg6: memref<128x128xf32, #tpu.memory_space<vmem>>, %arg7: memref<1x128xf32, #tpu.memory_space<vmem>>, %arg8: memref<128x128xf32, #tpu.memory_space<vmem>>, %arg9: memref<1x128xf32, #tpu.memory_space<vmem>>, %arg10: memref<2x8x128xf32, #tpu.memory_space<vmem>>) attributes {dimension_semantics = [#tpu.dimension_semantics<parallel>], iteration_bounds = array<i64: 1>, scalar_prefetch = 0 : i64, scratch_operands = 0 : i64, tpu.core_type = #tpu.core_type<tc>, window_params = [{transform_indices = @transform_0, window_bounds = array<i64: 2, 16, 128>}, {transform_indices = @transform_1, window_bounds = array<i64: 2, 8, 128>}, {transform_indices = @transform_2, window_bounds = array<i64: 2, 1, 16>}, {pipeline_mode = #tpu.pipeline_mode<synchronous>, transform_indices = @transform_3, window_bounds = array<i64: 128, 128>}, {pipeline_mode = #tpu.pipeline_mode<synchronous>, transform_indices = @transform_4, window_bounds = array<i64: 1, 128>}, {pipeline_mode = #tpu.pipeline_mode<synchronous>, transform_indices = @transform_5, window_bounds = array<i64: 128, 128>}, {pipeline_mode = #tpu.pipeline_mode<synchronous>, transform_indices = @transform_6, window_bounds = array<i64: 1, 128>}, {pipeline_mode = #tpu.pipeline_mode<synchronous>, transform_indices = @transform_7, window_bounds = array<i64: 128, 128>}, {pipeline_mode = #tpu.pipeline_mode<synchronous>, transform_indices = @transform_8, window_bounds = array<i64: 1, 128>}, {transform_indices = @transform_9, window_bounds = array<i64: 2, 8, 128>}]} {
    %c0 = arith.constant 0 : index
    %c0_0 = arith.constant 0 : index
    %c0_1 = arith.constant 0 : index
    %0 = vector.load %arg1[%c0, %c0_0, %c0_1] : memref<2x16x128xf32, #tpu.memory_space<vmem>>, vector<2x16x128xf32>
    %1 = vector.shape_cast %0 : vector<2x16x128xf32> to vector<32x128xf32>
    %c0_2 = arith.constant 0 : index
    %c0_3 = arith.constant 0 : index
    %c0_4 = arith.constant 0 : index
    %2 = vector.load %arg2[%c0_2, %c0_3, %c0_4] : memref<2x8x128xf32, #tpu.memory_space<vmem>>, vector<2x8x128xf32>
    %3 = vector.shape_cast %2 : vector<2x8x128xf32> to vector<16x128xf32>
    %c0_5 = arith.constant 0 : index
    %c0_6 = arith.constant 0 : index
    %4 = vector.load %arg4[%c0_5, %c0_6] : memref<128x128xf32, #tpu.memory_space<vmem>>, vector<128x128xf32>
    %cst = arith.constant dense<0.000000e+00> : vector<16x128xf32>
    %5 = tpu.matmul %3, %4, %cst {dimension_numbers = #tpu.dot_dimension_numbers<[1], [0], [0], [1], [0, 0, 1, 1], [], []>} : vector<16x128xf32>, vector<128x128xf32>, vector<16x128xf32> -> vector<16x128xf32>
    %c0_7 = arith.constant 0 : index
    %c0_8 = arith.constant 0 : index
    %6 = vector.load %arg5[%c0_7, %c0_8] : memref<1x128xf32, #tpu.memory_space<vmem>>, vector<1x128xf32>
    %7 = vector.broadcast %6 : vector<1x128xf32> to vector<16x128xf32>
    %8 = arith.addf %5, %7 : vector<16x128xf32>
    %9 = vector.shape_cast %8 : vector<16x128xf32> to vector<2x8x128xf32>
    %c0_9 = arith.constant 0 : index
    %c0_10 = arith.constant 0 : index
    %10 = vector.load %arg6[%c0_9, %c0_10] : memref<128x128xf32, #tpu.memory_space<vmem>>, vector<128x128xf32>
    %cst_11 = arith.constant dense<0.000000e+00> : vector<32x128xf32>
    %11 = tpu.matmul %1, %10, %cst_11 {dimension_numbers = #tpu.dot_dimension_numbers<[1], [0], [0], [1], [0, 0, 1, 1], [], []>} : vector<32x128xf32>, vector<128x128xf32>, vector<32x128xf32> -> vector<32x128xf32>
    %c0_12 = arith.constant 0 : index
    %c0_13 = arith.constant 0 : index
    %12 = vector.load %arg7[%c0_12, %c0_13] : memref<1x128xf32, #tpu.memory_space<vmem>>, vector<1x128xf32>
    %13 = vector.broadcast %12 : vector<1x128xf32> to vector<32x128xf32>
    %14 = arith.addf %11, %13 : vector<32x128xf32>
    %15 = vector.shape_cast %14 : vector<32x128xf32> to vector<2x16x128xf32>
    %c0_14 = arith.constant 0 : index
    %c0_15 = arith.constant 0 : index
    %16 = vector.load %arg8[%c0_14, %c0_15] : memref<128x128xf32, #tpu.memory_space<vmem>>, vector<128x128xf32>
    %cst_16 = arith.constant dense<0.000000e+00> : vector<32x128xf32>
    %17 = tpu.matmul %1, %16, %cst_16 {dimension_numbers = #tpu.dot_dimension_numbers<[1], [0], [0], [1], [0, 0, 1, 1], [], []>} : vector<32x128xf32>, vector<128x128xf32>, vector<32x128xf32> -> vector<32x128xf32>
    %c0_17 = arith.constant 0 : index
    %c0_18 = arith.constant 0 : index
    %18 = vector.load %arg9[%c0_17, %c0_18] : memref<1x128xf32, #tpu.memory_space<vmem>>, vector<1x128xf32>
    %19 = vector.broadcast %18 : vector<1x128xf32> to vector<32x128xf32>
    %20 = arith.addf %17, %19 : vector<32x128xf32>
    %21 = vector.shape_cast %20 : vector<32x128xf32> to vector<2x16x128xf32>
    %cst_19 = arith.constant dense<0.000000e+00> : vector<2x8x16xf32>
    %22 = tpu.matmul %9, %15, %cst_19 {dimension_numbers = #tpu.dot_dimension_numbers<[2], [2], [1], [1], [0, 0, 0, 1, 1, 1], [0], [0]>} : vector<2x8x128xf32>, vector<2x16x128xf32>, vector<2x8x16xf32> -> vector<2x8x16xf32>
    %c0_20 = arith.constant 0 : index
    %c0_21 = arith.constant 0 : index
    %c0_22 = arith.constant 0 : index
    %23 = vector.load %arg3[%c0_20, %c0_21, %c0_22] : memref<2x1x16xf32, #tpu.memory_space<vmem>>, vector<2x1x16xf32>
    %24 = vector.broadcast %23 : vector<2x1x16xf32> to vector<2x8x16xf32>
    %25 = arith.addf %22, %24 : vector<2x8x16xf32>
    %cst_23 = arith.constant dense<0xFF800000> : vector<2x8xf32>
    %26 = vector.multi_reduction <maximumf>, %25, %cst_23 [2] : vector<2x8x16xf32> to vector<2x8xf32>
    %27 = vector.shape_cast %26 : vector<2x8xf32> to vector<2x8x1xf32>
    %28 = vector.broadcast %27 : vector<2x8x1xf32> to vector<2x8x16xf32>
    %29 = arith.subf %25, %28 : vector<2x8x16xf32>
    %30 = math.exp %29 : vector<2x8x16xf32>
    %cst_24 = arith.constant dense<0.000000e+00> : vector<2x8xf32>
    %31 = vector.multi_reduction <add>, %30, %cst_24 [2] : vector<2x8x16xf32> to vector<2x8xf32>
    %32 = vector.shape_cast %31 : vector<2x8xf32> to vector<2x8x1xf32>
    %33 = tpu.reciprocal %32 : vector<2x8x1xf32> -> vector<2x8x1xf32>
    %34 = vector.broadcast %33 : vector<2x8x1xf32> to vector<2x8x16xf32>
    %35 = arith.mulf %30, %34 : vector<2x8x16xf32>
    %cst_25 = arith.constant dense<0.000000e+00> : vector<2x8x128xf32>
    %36 = tpu.matmul %35, %21, %cst_25 {dimension_numbers = #tpu.dot_dimension_numbers<[2], [1], [1], [2], [0, 0, 0, 1, 1, 2], [0], [0]>} : vector<2x8x16xf32>, vector<2x16x128xf32>, vector<2x8x128xf32> -> vector<2x8x128xf32>
    %c0_26 = arith.constant 0 : index
    %c0_27 = arith.constant 0 : index
    %c0_28 = arith.constant 0 : index
    %37 = vector.load %arg10[%c0_26, %c0_27, %c0_28] : memref<2x8x128xf32, #tpu.memory_space<vmem>>, vector<2x8x128xf32>
    tpu.vector_store %arg10[%c0_26, %c0_27, %c0_28], %36 {strides = array<i32>} : memref<2x8x128xf32, #tpu.memory_space<vmem>>, vector<2x8x128xf32>,
    return
  }
  func.func @transform_0(%arg0: i32) -> (i32, i32, i32) {
    %c0_i32 = arith.constant 0 : i32
    %c0_i32_0 = arith.constant 0 : i32
    %c0_i32_1 = arith.constant 0 : i32
    return %arg0, %c0_i32, %c0_i32_0 : i32, i32, i32
  }
  func.func @transform_1(%arg0: i32) -> (i32, i32, i32) {
    %c0_i32 = arith.constant 0 : i32
    %c0_i32_0 = arith.constant 0 : i32
    %c0_i32_1 = arith.constant 0 : i32
    return %arg0, %c0_i32, %c0_i32_0 : i32, i32, i32
  }
  func.func @transform_2(%arg0: i32) -> (i32, i32, i32) {
    %c0_i32 = arith.constant 0 : i32
    %c0_i32_0 = arith.constant 0 : i32
    %c0_i32_1 = arith.constant 0 : i32
    return %arg0, %c0_i32, %c0_i32_0 : i32, i32, i32
  }
  func.func @transform_3(%arg0: i32) -> (i32, i32) {
    %c0_i32 = arith.constant 0 : i32
    %c0_i32_0 = arith.constant 0 : i32
    %c0_i32_1 = arith.constant 0 : i32
    return %c0_i32, %c0_i32_0 : i32, i32
  }
  func.func @transform_4(%arg0: i32) -> (i32, i32) {
    %c0_i32 = arith.constant 0 : i32
    %c0_i32_0 = arith.constant 0 : i32
    %c0_i32_1 = arith.constant 0 : i32
    return %c0_i32, %c0_i32_0 : i32, i32
  }
  func.func @transform_5(%arg0: i32) -> (i32, i32) {
    %c0_i32 = arith.constant 0 : i32
    %c0_i32_0 = arith.constant 0 : i32
    %c0_i32_1 = arith.constant 0 : i32
    return %c0_i32, %c0_i32_0 : i32, i32
  }
  func.func @transform_6(%arg0: i32) -> (i32, i32) {
    %c0_i32 = arith.constant 0 : i32
    %c0_i32_0 = arith.constant 0 : i32
    %c0_i32_1 = arith.constant 0 : i32
    return %c0_i32, %c0_i32_0 : i32, i32
  }
  func.func @transform_7(%arg0: i32) -> (i32, i32) {
    %c0_i32 = arith.constant 0 : i32
    %c0_i32_0 = arith.constant 0 : i32
    %c0_i32_1 = arith.constant 0 : i32
    return %c0_i32, %c0_i32_0 : i32, i32
  }
  func.func @transform_8(%arg0: i32) -> (i32, i32) {
    %c0_i32 = arith.constant 0 : i32
    %c0_i32_0 = arith.constant 0 : i32
    %c0_i32_1 = arith.constant 0 : i32
    return %c0_i32, %c0_i32_0 : i32, i32
  }
  func.func @transform_9(%arg0: i32) -> (i32, i32, i32) {
    %c0_i32 = arith.constant 0 : i32
    %c0_i32_0 = arith.constant 0 : i32
    %c0_i32_1 = arith.constant 0 : i32
    return %arg0, %c0_i32, %c0_i32_0 : i32, i32, i32
  }
}

module attributes {stable_mosaic.version = 11 : i64} {
  func.func @_attention_pooling_kernel(%arg0: i32, %arg1: memref<2x16x128xf32, #tpu.memory_space<vmem>>, %arg2: memref<2x8x128xf32, #tpu.memory_space<vmem>>, %arg3: memref<2x1x16xf32, #tpu.memory_space<vmem>>, %arg4: memref<128x128xf32, #tpu.memory_space<vmem>>, %arg5: memref<1x128xf32, #tpu.memory_space<vmem>>, %arg6: memref<128x128xf32, #tpu.memory_space<vmem>>, %arg7: memref<1x128xf32, #tpu.memory_space<vmem>>, %arg8: memref<128x128xf32, #tpu.memory_space<vmem>>, %arg9: memref<1x128xf32, #tpu.memory_space<vmem>>, %arg10: memref<2x8x128xf32, #tpu.memory_space<vmem>>) attributes {dimension_semantics = [#tpu.dimension_semantics<parallel>], iteration_bounds = array<i64: 1>, scalar_prefetch = 0 : i64, scratch_operands = 0 : i64, tpu.core_type = #tpu.core_type<tc>, window_params = [{transform_indices = @transform_0, window_bounds = array<i64: 2, 16, 128>}, {transform_indices = @transform_1, window_bounds = array<i64: 2, 8, 128>}, {transform_indices = @transform_2, window_bounds = array<i64: 2, 1, 16>}, {pipeline_mode = #tpu.pipeline_mode<synchronous>, transform_indices = @transform_3, window_bounds = array<i64: 128, 128>}, {pipeline_mode = #tpu.pipeline_mode<synchronous>, transform_indices = @transform_4, window_bounds = array<i64: 1, 128>}, {pipeline_mode = #tpu.pipeline_mode<synchronous>, transform_indices = @transform_5, window_bounds = array<i64: 128, 128>}, {pipeline_mode = #tpu.pipeline_mode<synchronous>, transform_indices = @transform_6, window_bounds = array<i64: 1, 128>}, {pipeline_mode = #tpu.pipeline_mode<synchronous>, transform_indices = @transform_7, window_bounds = array<i64: 128, 128>}, {pipeline_mode = #tpu.pipeline_mode<synchronous>, transform_indices = @transform_8, window_bounds = array<i64: 1, 128>}, {transform_indices = @transform_9, window_bounds = array<i64: 2, 8, 128>}]} {
    %c0 = arith.constant 0 : index
    %c0_0 = arith.constant 0 : index
    %c0_1 = arith.constant 0 : index
    %0 = vector.load %arg1[%c0, %c0_0, %c0_1] : memref<2x16x128xf32, #tpu.memory_space<vmem>>, vector<2x16x128xf32>
    %1 = vector.shape_cast %0 : vector<2x16x128xf32> to vector<32x128xf32>
    %c0_2 = arith.constant 0 : index
    %c0_3 = arith.constant 0 : index
    %c0_4 = arith.constant 0 : index
    %2 = vector.load %arg2[%c0_2, %c0_3, %c0_4] : memref<2x8x128xf32, #tpu.memory_space<vmem>>, vector<2x8x128xf32>
    %3 = vector.shape_cast %2 : vector<2x8x128xf32> to vector<16x128xf32>
    %c0_5 = arith.constant 0 : index
    %c0_6 = arith.constant 0 : index
    %4 = vector.load %arg4[%c0_5, %c0_6] : memref<128x128xf32, #tpu.memory_space<vmem>>, vector<128x128xf32>
    %cst = arith.constant dense<0.000000e+00> : vector<16x128xf32>
    %5 = tpu.matmul %3, %4, %cst {dimension_numbers = #tpu.dot_dimension_numbers<[1], [0], [0], [1], [0, 0, 1, 1], [], []>} : vector<16x128xf32>, vector<128x128xf32>, vector<16x128xf32> -> vector<16x128xf32>
    %c0_7 = arith.constant 0 : index
    %c0_8 = arith.constant 0 : index
    %6 = vector.load %arg5[%c0_7, %c0_8] : memref<1x128xf32, #tpu.memory_space<vmem>>, vector<1x128xf32>
    %7 = vector.broadcast %6 : vector<1x128xf32> to vector<16x128xf32>
    %8 = arith.addf %5, %7 : vector<16x128xf32>
    %9 = vector.shape_cast %8 : vector<16x128xf32> to vector<2x8x128xf32>
    %c0_9 = arith.constant 0 : index
    %c0_10 = arith.constant 0 : index
    %10 = vector.load %arg6[%c0_9, %c0_10] : memref<128x128xf32, #tpu.memory_space<vmem>>, vector<128x128xf32>
    %cst_11 = arith.constant dense<0.000000e+00> : vector<32x128xf32>
    %11 = tpu.matmul %1, %10, %cst_11 {dimension_numbers = #tpu.dot_dimension_numbers<[1], [0], [0], [1], [0, 0, 1, 1], [], []>} : vector<32x128xf32>, vector<128x128xf32>, vector<32x128xf32> -> vector<32x128xf32>
    %c0_12 = arith.constant 0 : index
    %c0_13 = arith.constant 0 : index
    %12 = vector.load %arg7[%c0_12, %c0_13] : memref<1x128xf32, #tpu.memory_space<vmem>>, vector<1x128xf32>
    %13 = vector.broadcast %12 : vector<1x128xf32> to vector<32x128xf32>
    %14 = arith.addf %11, %13 : vector<32x128xf32>
    %15 = vector.shape_cast %14 : vector<32x128xf32> to vector<2x16x128xf32>
    %c0_14 = arith.constant 0 : index
    %c0_15 = arith.constant 0 : index
    %16 = vector.load %arg8[%c0_14, %c0_15] : memref<128x128xf32, #tpu.memory_space<vmem>>, vector<128x128xf32>
    %cst_16 = arith.constant dense<0.000000e+00> : vector<32x128xf32>
    %17 = tpu.matmul %1, %16, %cst_16 {dimension_numbers = #tpu.dot_dimension_numbers<[1], [0], [0], [1], [0, 0, 1, 1], [], []>} : vector<32x128xf32>, vector<128x128xf32>, vector<32x128xf32> -> vector<32x128xf32>
    %c0_17 = arith.constant 0 : index
    %c0_18 = arith.constant 0 : index
    %18 = vector.load %arg9[%c0_17, %c0_18] : memref<1x128xf32, #tpu.memory_space<vmem>>, vector<1x128xf32>
    %19 = vector.broadcast %18 : vector<1x128xf32> to vector<32x128xf32>
    %20 = arith.addf %17, %19 : vector<32x128xf32>
    %21 = vector.shape_cast %20 : vector<32x128xf32> to vector<2x16x128xf32>
    %cst_19 = arith.constant dense<0.000000e+00> : vector<2x8x16xf32>
    %22 = tpu.matmul %9, %15, %cst_19 {dimension_numbers = #tpu.dot_dimension_numbers<[2], [2], [1], [1], [0, 0, 0, 1, 1, 1], [0], [0]>} : vector<2x8x128xf32>, vector<2x16x128xf32>, vector<2x8x16xf32> -> vector<2x8x16xf32>
    %c0_20 = arith.constant 0 : index
    %c0_21 = arith.constant 0 : index
    %c0_22 = arith.constant 0 : index
    %23 = vector.load %arg3[%c0_20, %c0_21, %c0_22] : memref<2x1x16xf32, #tpu.memory_space<vmem>>, vector<2x1x16xf32>
    %24 = vector.broadcast %23 : vector<2x1x16xf32> to vector<2x8x16xf32>
    %25 = arith.addf %22, %24 : vector<2x8x16xf32>
    %cst_23 = arith.constant dense<0xFF800000> : vector<2x8xf32>
    %26 = vector.multi_reduction <maximumf>, %25, %cst_23 [2] : vector<2x8x16xf32> to vector<2x8xf32>
    %27 = vector.shape_cast %26 : vector<2x8xf32> to vector<2x8x1xf32>
    %28 = vector.broadcast %27 : vector<2x8x1xf32> to vector<2x8x16xf32>
    %29 = arith.subf %25, %28 : vector<2x8x16xf32>
    %30 = math.exp %29 : vector<2x8x16xf32>
    %cst_24 = arith.constant dense<0.000000e+00> : vector<2x8xf32>
    %31 = vector.multi_reduction <add>, %30, %cst_24 [2] : vector<2x8x16xf32> to vector<2x8xf32>
    %32 = vector.shape_cast %31 : vector<2x8xf32> to vector<2x8x1xf32>
    %33 = tpu.reciprocal %32 : vector<2x8x1xf32> -> vector<2x8x1xf32>
    %34 = vector.broadcast %33 : vector<2x8x1xf32> to vector<2x8x16xf32>
    %35 = arith.mulf %30, %34 : vector<2x8x16xf32>
    %cst_25 = arith.constant dense<0.000000e+00> : vector<2x8x128xf32>
    %36 = tpu.matmul %35, %21, %cst_25 {dimension_numbers = #tpu.dot_dimension_numbers<[2], [1], [1], [2], [0, 0, 0, 1, 1, 2], [0], [0]>} : vector<2x8x16xf32>, vector<2x16x128xf32>, vector<2x8x128xf32> -> vector<2x8x128xf32>
    %c0_26 = arith.constant 0 : index
    %c0_27 = arith.constant 0 : index
    %c0_28 = arith.constant 0 : index
    %37 = vector.load %arg10[%c0_26, %c0_27, %c0_28] : memref<2x8x128xf32, #tpu.memory_space<vmem>>, vector<2x8x128xf32>
    tpu.vector_store %arg10[%c0_26, %c0_27, %c0_28], %36 {strides = array<i32>} : memref<2x8x128xf32, #tpu.memory_space<vmem>>, vector<2x8x128xf32>,
    return
  }
  func.func @transform_0(%arg0: i32) -> (i32, i32, i32) {
    %c0_i32 = arith.constant 0 : i32
    %c0_i32_0 = arith.constant 0 : i32
    %c0_i32_1 = arith.constant 0 : i32
    return %arg0, %c0_i32, %c0_i32_0 : i32, i32, i32
  }
  func.func @transform_1(%arg0: i32) -> (i32, i32, i32) {
    %c0_i32 = arith.constant 0 : i32
    %c0_i32_0 = arith.constant 0 : i32
    %c0_i32_1 = arith.constant 0 : i32
    return %arg0, %c0_i32, %c0_i32_0 : i32, i32, i32
  }
  func.func @transform_2(%arg0: i32) -> (i32, i32, i32) {
    %c0_i32 = arith.constant 0 : i32
    %c0_i32_0 = arith.constant 0 : i32
    %c0_i32_1 = arith.constant 0 : i32
    return %arg0, %c0_i32, %c0_i32_0 : i32, i32, i32
  }
  func.func @transform_3(%arg0: i32) -> (i32, i32) {
    %c0_i32 = arith.constant 0 : i32
    %c0_i32_0 = arith.constant 0 : i32
    %c0_i32_1 = arith.constant 0 : i32
    return %c0_i32, %c0_i32_0 : i32, i32
  }
  func.func @transform_4(%arg0: i32) -> (i32, i32) {
    %c0_i32 = arith.constant 0 : i32
    %c0_i32_0 = arith.constant 0 : i32
    %c0_i32_1 = arith.constant 0 : i32
    return %c0_i32, %c0_i32_0 : i32, i32
  }
  func.func @transform_5(%arg0: i32) -> (i32, i32) {
    %c0_i32 = arith.constant 0 : i32
    %c0_i32_0 = arith.constant 0 : i32
    %c0_i32_1 = arith.constant 0 : i32
    return %c0_i32, %c0_i32_0 : i32, i32
  }
  func.func @transform_6(%arg0: i32) -> (i32, i32) {
    %c0_i32 = arith.constant 0 : i32
    %c0_i32_0 = arith.constant 0 : i32
    %c0_i32_1 = arith.constant 0 : i32
    return %c0_i32, %c0_i32_0 : i32, i32
  }
  func.func @transform_7(%arg0: i32) -> (i32, i32) {
    %c0_i32 = arith.constant 0 : i32
    %c0_i32_0 = arith.constant 0 : i32
    %c0_i32_1 = arith.constant 0 : i32
    return %c0_i32, %c0_i32_0 : i32, i32
  }
  func.func @transform_8(%arg0: i32) -> (i32, i32) {
    %c0_i32 = arith.constant 0 : i32
    %c0_i32_0 = arith.constant 0 : i32
    %c0_i32_1 = arith.constant 0 : i32
    return %c0_i32, %c0_i32_0 : i32, i32
  }
  func.func @transform_9(%arg0: i32) -> (i32, i32, i32) {
    %c0_i32 = arith.constant 0 : i32
    %c0_i32_0 = arith.constant 0 : i32
    %c0_i32_1 = arith.constant 0 : i32
    return %arg0, %c0_i32, %c0_i32_0 : i32, i32, i32
  }
}

</mosaic_0001>

<llo_original>
// kernel: tpu_custom_call.1
$region0: #{tpu_custom_call.1}
  #allocation0 [shape = 'u32[]', space=smem, size = 0x4, offset = 0x4, fixed_abs, tag = 'smem constant byte address 0x4 - core index']
  #allocation1 [shape = 'u32[144,128]{1,0:T(1,128)}', space=vmem, size = 0x12000, scoped, tag = 'internal scratch']
  %s0 = inlined_call_operand.hbm [shape: f32[2,16,128], index: 0, kind: input, shape index: {}]
  %s1 = inlined_call_operand.hbm [shape: f32[2,8,128], index: 1, kind: input, shape index: {}]
  %s2 = inlined_call_operand.vmem [shape: f32[2,1,16], index: 2, kind: input, shape index: {}]
  %s3 = inlined_call_operand.hbm [shape: f32[128,128], index: 3, kind: input, shape index: {}]
  %s4 = inlined_call_operand.vmem [shape: f32[1,128], index: 4, kind: input, shape index: {}]
  %s5 = inlined_call_operand.hbm [shape: f32[128,128], index: 5, kind: input, shape index: {}]
  %s6 = inlined_call_operand.vmem [shape: f32[1,128], index: 6, kind: input, shape index: {}]
  %s7 = inlined_call_operand.hbm [shape: f32[128,128], index: 7, kind: input, shape index: {}]
  %s8 = inlined_call_operand.vmem [shape: f32[1,128], index: 8, kind: input, shape index: {}]
  %s9 = inlined_call_operand.hbm [shape: f32[2,8,128], index: 9, kind: output, shape index: {}]
  %s10 = sld [smem:[#allocation0]]
  $region66: #{tpu_custom_call.1} parent=0
    _
  %s12 = ssub.s32 1, %s10
  %s13 = scalar_select 0, %s12, %s10
  $region1: #{tpu_custom_call.1} parent=0
    #allocation2 [shape = 'u8[16384]{0}', space=vmem, size = 0x4000, scoped, tag = 'input window, operand 0, single buffered']
    #allocation3 [shape = 's32[1]{0}', space=sflag, size = 0x4, scoped, tag = 'scoped memory for tpu_custom_call.1']
    #allocation4 [shape = 's32[1]{0}', space=sflag, size = 0x4, scoped, tag = 'scoped memory for tpu_custom_call.1']
    #allocation5 [shape = 'u8[8192]{0}', space=vmem, size = 0x2000, scoped, tag = 'input window, operand 1, single buffered']
    #allocation6 [shape = 's32[1]{0}', space=sflag, size = 0x4, scoped, tag = 'scoped memory for tpu_custom_call.1']
    #allocation7 [shape = 'u8[65536]{0}', space=vmem, size = 0x10000, scoped, tag = 'input window, operand 3, single buffered']
    #allocation8 [shape = 'u8[65536]{0}', space=vmem, size = 0x10000, scoped, tag = 'input window, operand 5, single buffered']
    #allocation9 [shape = 's32[1]{0}', space=sflag, size = 0x4, scoped, tag = 'scoped memory for tpu_custom_call.1']
    #allocation10 [shape = 'u8[65536]{0}', space=vmem, size = 0x10000, scoped, tag = 'input window, operand 7, single buffered']
    #allocation11 [shape = 'u8[8192]{0}', space=vmem, size = 0x2000, scoped, tag = 'output window, operand 0, single buffered']
    %14 = vsyncpa [#allocation3], 0
    %15 = vsyncpa [#allocation6], 0
    %16 = vsyncpa [#allocation9], 0
    %17 = vsyncpa [#allocation4], 0
    // Predicated region
    $region2: #{tpu_custom_call.1} parent=1 // pred_check
      _
    $region3: #{tpu_custom_call.1} parent=1 // pred_check_branch
      %19 = sbr.rel (0) target = $region5
    $region4: #{tpu_custom_call.1} parent=1 // pred_region
      %s21 = ssub.s32 512, 512
      %22 = vsyncadd [#allocation3], %s21
      %s23 = sshll.u32 [#allocation2], 4
      %s24 = int_to_ptr.vmem [resolvable:$true] %s23
      %29 = dma.hbm_to_vmem [thread:$0]  %s0, 512, %s24, [#allocation3], 128, 128, 8
    $region5: #{tpu_custom_call.1} parent=1 // pred_fallthru
      _
    // Predicated region
    $region6: #{tpu_custom_call.1} parent=1 // pred_check
      _
    $region7: #{tpu_custom_call.1} parent=1 // pred_check_branch
      %31 = sbr.rel (0) target = $region9
    $region8: #{tpu_custom_call.1} parent=1 // pred_region
      %s33 = ssub.s32 256, 256
      %34 = vsyncadd [#allocation6], %s33
      %s35 = sshll.u32 [#allocation5], 4
      %s36 = int_to_ptr.vmem [resolvable:$true] %s35
      %41 = dma.hbm_to_vmem [thread:$0]  %s1, 256, %s36, [#allocation6], 128, 128, 8
    $region9: #{tpu_custom_call.1} parent=1 // pred_fallthru
      _
    // Predicated region
    $region10: #{tpu_custom_call.1} parent=1 // pred_check
      _
    $region11: #{tpu_custom_call.1} parent=1 // pred_check_branch
      %43 = sbr.rel (0) target = $region13
    $region12: #{tpu_custom_call.1} parent=1 // pred_region
      _
    $region13: #{tpu_custom_call.1} parent=1 // pred_fallthru
      _
    // Predicated region
    $region14: #{tpu_custom_call.1} parent=1 // pred_check
      _
    $region15: #{tpu_custom_call.1} parent=1 // pred_check_branch
      %45 = sbr.rel (0) target = $region17
    $region16: #{tpu_custom_call.1} parent=1 // pred_region
      %s47 = ssub.s32 2048, 2048
      %48 = vsyncadd [#allocation6], %s47
      %s49 = sshll.u32 [#allocation7], 4
      %s50 = int_to_ptr.vmem [resolvable:$true] %s49
      %55 = dma.hbm_to_vmem [thread:$0]  %s3, 2048, %s50, [#allocation6], 128, 128, 8
    $region17: #{tpu_custom_call.1} parent=1 // pred_fallthru
      _
    // Predicated region
    $region18: #{tpu_custom_call.1} parent=1 // pred_check
      _
    $region19: #{tpu_custom_call.1} parent=1 // pred_check_branch
      %57 = sbr.rel (0) target = $region21
    $region20: #{tpu_custom_call.1} parent=1 // pred_region
      _
    $region21: #{tpu_custom_call.1} parent=1 // pred_fallthru
      _
    // Predicated region
    $region22: #{tpu_custom_call.1} parent=1 // pred_check
      _
    $region23: #{tpu_custom_call.1} parent=1 // pred_check_branch
      %59 = sbr.rel (0) target = $region25
    $region24: #{tpu_custom_call.1} parent=1 // pred_region
      %s61 = ssub.s32 2048, 2048
      %62 = vsyncadd [#allocation9], %s61
      %s63 = sshll.u32 [#allocation8], 4
      %s64 = int_to_ptr.vmem [resolvable:$true] %s63
      %69 = dma.hbm_to_vmem [thread:$0]  %s5, 2048, %s64, [#allocation9], 128, 128, 8
    $region25: #{tpu_custom_call.1} parent=1 // pred_fallthru
      _
    // Predicated region
    $region26: #{tpu_custom_call.1} parent=1 // pred_check
      _
    $region27: #{tpu_custom_call.1} parent=1 // pred_check_branch
      %71 = sbr.rel (0) target = $region29
    $region28: #{tpu_custom_call.1} parent=1 // pred_region
      _
    $region29: #{tpu_custom_call.1} parent=1 // pred_fallthru
      _
    // Predicated region
    $region30: #{tpu_custom_call.1} parent=1 // pred_check
      _
    $region31: #{tpu_custom_call.1} parent=1 // pred_check_branch
      %73 = sbr.rel (0) target = $region33
    $region32: #{tpu_custom_call.1} parent=1 // pred_region
      %s75 = ssub.s32 2048, 2048
      %76 = vsyncadd [#allocation9], %s75
      %s77 = sshll.u32 [#allocation10], 4
      %s78 = int_to_ptr.vmem [resolvable:$true] %s77
      %83 = dma.hbm_to_vmem [thread:$0]  %s7, 2048, %s78, [#allocation9], 128, 128, 8
    $region33: #{tpu_custom_call.1} parent=1 // pred_fallthru
      _
    // Predicated region
    $region34: #{tpu_custom_call.1} parent=1 // pred_check
      _
    $region35: #{tpu_custom_call.1} parent=1 // pred_check_branch
      %85 = sbr.rel (0) target = $region37
    $region36: #{tpu_custom_call.1} parent=1 // pred_region
      _
    $region37: #{tpu_custom_call.1} parent=1 // pred_fallthru
      _
    // Predicated region
    $region38: #{tpu_custom_call.1} parent=1 // pred_check
      _
    $region39: #{tpu_custom_call.1} parent=1 // pred_check_branch
      %87 = sbr.rel (0) target = $region41
    $region40: #{tpu_custom_call.1} parent=1 // pred_region
      %88 = dma.done [#allocation3], 512
    $region41: #{tpu_custom_call.1} parent=1 // pred_fallthru
      _
    // Predicated region
    $region42: #{tpu_custom_call.1} parent=1 // pred_check
      _
    $region43: #{tpu_custom_call.1} parent=1 // pred_check_branch
      %90 = sbr.rel (0) target = $region45
    $region44: #{tpu_custom_call.1} parent=1 // pred_region
      %91 = dma.done [#allocation6], 256
    $region45: #{tpu_custom_call.1} parent=1 // pred_fallthru
      _
    // Predicated region
    $region46: #{tpu_custom_call.1} parent=1 // pred_check
      _
    $region47: #{tpu_custom_call.1} parent=1 // pred_check_branch
      %93 = sbr.rel (0) target = $region49
    $region48: #{tpu_custom_call.1} parent=1 // pred_region
      %94 = dma.done [#allocation6], 2048
    $region49: #{tpu_custom_call.1} parent=1 // pred_fallthru
      _
    // Predicated region
    $region50: #{tpu_custom_call.1} parent=1 // pred_check
      _
    $region51: #{tpu_custom_call.1} parent=1 // pred_check_branch
      %96 = sbr.rel (0) target = $region53
    $region52: #{tpu_custom_call.1} parent=1 // pred_region
      %97 = dma.done [#allocation9], 2048
    $region53: #{tpu_custom_call.1} parent=1 // pred_fallthru
      _
    // Predicated region
    $region54: #{tpu_custom_call.1} parent=1 // pred_check
      _
    $region55: #{tpu_custom_call.1} parent=1 // pred_check_branch
      %99 = sbr.rel (0) target = $region57
    $region56: #{tpu_custom_call.1} parent=1 // pred_region
      %100 = dma.done [#allocation9], 2048
    $region57: #{tpu_custom_call.1} parent=1 // pred_fallthru
      _
    %v101 = vld [vmem:[#allocation2] sm:$0xff]
    %v102 = vld [vmem:[#allocation2 + $0x8] sm:$0xff]
    %v103 = vld [vmem:[#allocation2 + $0x10] sm:$0xff]
    %v104 = vld [vmem:[#allocation2 + $0x18] sm:$0xff]
    %v105 = vld [vmem:[#allocation5] sm:$0xff]
    %v106 = vld [vmem:[#allocation5 + $0x8] sm:$0xff]
    %v107 = vld [vmem:[#allocation7] sm:$0xff]
    %v108 = vld [vmem:[#allocation7 + $0x8] sm:$0xff]
    %v109 = vld [vmem:[#allocation7 + $0x10] sm:$0xff]
    %v110 = vld [vmem:[#allocation7 + $0x18] sm:$0xff]
    %v111 = vld [vmem:[#allocation7 + $0x20] sm:$0xff]
    %v112 = vld [vmem:[#allocation7 + $0x28] sm:$0xff]
    %v113 = vld [vmem:[#allocation7 + $0x30] sm:$0xff]
    %v114 = vld [vmem:[#allocation7 + $0x38] sm:$0xff]
    %v115 = vld [vmem:[#allocation7 + $0x40] sm:$0xff]
    %v116 = vld [vmem:[#allocation7 + $0x48] sm:$0xff]
    %v117 = vld [vmem:[#allocation7 + $0x50] sm:$0xff]
    %v118 = vld [vmem:[#allocation7 + $0x58] sm:$0xff]
    %v119 = vld [vmem:[#allocation7 + $0x60] sm:$0xff]
    %v120 = vld [vmem:[#allocation7 + $0x68] sm:$0xff]
    %v121 = vld [vmem:[#allocation7 + $0x70] sm:$0xff]
    %v122 = vld [vmem:[#allocation7 + $0x78] sm:$0xff]
    %v123 = vld [vmem:[%s4] sm:$0x1]
    %v125 = vlaneseq
    %v126 = vshrl.u32 %v125, 7
    %v127 = vsub.s32 0, %v126
    %v128 = vrot.slane %v123, %v127
    %130 = vmatprep.subr.mxu0 0.0
    %131 = vmatpush1.msra.mxu0 %v107
    %132 = vmatprep.subr.mxu0 0.0
    %133 = vmatpush1.msra.mxu0 %v108
    %134 = vmatprep.subr.mxu0 0.0
    %135 = vmatpush1.msra.mxu0 %v109
    %136 = vmatprep.subr.mxu0 0.0
    %137 = vmatpush1.msra.mxu0 %v110
    %138 = vmatprep.subr.mxu0 0.0
    %139 = vmatpush1.msra.mxu0 %v111
    %140 = vmatprep.subr.mxu0 0.0
    %141 = vmatpush1.msra.mxu0 %v112
    %142 = vmatprep.subr.mxu0 0.0
    %143 = vmatpush1.msra.mxu0 %v113
    %144 = vmatprep.subr.mxu0 0.0
    %145 = vmatpush1.msra.mxu0 %v114
    %146 = vmatprep.subr.mxu0 0.0
    %147 = vmatpush1.msra.mxu0 %v115
    %148 = vmatprep.subr.mxu0 0.0
    %149 = vmatpush1.msra.mxu0 %v116
    %150 = vmatprep.subr.mxu0 0.0
    %151 = vmatpush1.msra.mxu0 %v117
    %152 = vmatprep.subr.mxu0 0.0
    %153 = vmatpush1.msra.mxu0 %v118
    %154 = vmatprep.subr.mxu0 0.0
    %155 = vmatpush1.msra.mxu0 %v119
    %156 = vmatprep.subr.mxu0 0.0
    %157 = vmatpush1.msra.mxu0 %v120
    %158 = vmatprep.subr.mxu0 0.0
    %159 = vmatpush1.msra.mxu0 %v121
    %160 = vmatprep.subr.mxu0 0.0
    %161 = vmatpush1.msra.mxu0 %v122
    %162 = vmatprep.subr.mxu0 0.0
    %163 = vmatpush1.msra.mxu0 0.0
    %164 = vmatprep.subr.mxu0 0.0
    %165 = vmatpush1.msra.mxu0 0.0
    %166 = vmatprep.subr.mxu0 0.0
    %167 = vmatpush1.msra.mxu0 0.0
    %168 = vmatprep.subr.mxu0 0.0
    %169 = vmatpush1.msra.mxu0 0.0
    %170 = vmatprep.subr.mxu0 0.0
    %171 = vmatpush1.msra.mxu0 0.0
    %172 = vmatprep.subr.mxu0 0.0
    %173 = vmatpush1.msra.mxu0 0.0
    %174 = vmatprep.subr.mxu0 0.0
    %175 = vmatpush1.msra.mxu0 0.0
    %176 = vmatprep.subr.mxu0 0.0
    %177 = vmatpush1.msra.mxu0 0.0
    %178 = vmatprep.subr.mxu0 0.0
    %179 = vmatpush1.msra.mxu0 0.0
    %180 = vmatprep.subr.mxu0 0.0
    %181 = vmatpush1.msra.mxu0 0.0
    %182 = vmatprep.subr.mxu0 0.0
    %183 = vmatpush1.msra.mxu0 0.0
    %184 = vmatprep.subr.mxu0 0.0
    %185 = vmatpush1.msra.mxu0 0.0
    %186 = vmatprep.subr.mxu0 0.0
    %187 = vmatpush1.msra.mxu0 0.0
    %188 = vmatprep.subr.mxu0 0.0
    %189 = vmatpush1.msra.mxu0 0.0
    %190 = vmatprep.subr.mxu0 0.0
    %191 = vmatpush1.msra.mxu0 0.0
    %192 = vmatprep.subr.mxu0 0.0
    %193 = vmatpush1.msra.mxu0 0.0
    %194 = vmatprep.mubr.f32.mxu0 0.0
    %195 = vmatmul.mubr.f32.gmra.mrb[0].mxu0 %v105
    %v196 = vpop.f32.mrb[0].mxu0
    %v197 = vadd.f32 %v128, %v196
    %v198 = vpop.f32.mrb[0].mxu0
    %199 = vmatprep.mubr.f32.mxu0 0.0
    %200 = vmatmul.mubr.f32.gmra.mrb[0].mxu0 %v106
    %v201 = vpop.f32.mrb[0].mxu0
    %v202 = vadd.f32 %v128, %v201
    %v203 = vpop.f32.mrb[0].mxu0
    %204 = vdwg.mxu0
    %v205 = vld [vmem:[#allocation8] sm:$0xff]
    %v206 = vld [vmem:[#allocation8 + $0x8] sm:$0xff]
    %v207 = vld [vmem:[#allocation8 + $0x10] sm:$0xff]
    %v208 = vld [vmem:[#allocation8 + $0x18] sm:$0xff]
    %v209 = vld [vmem:[#allocation8 + $0x20] sm:$0xff]
    %v210 = vld [vmem:[#allocation8 + $0x28] sm:$0xff]
    %v211 = vld [vmem:[#allocation8 + $0x30] sm:$0xff]
    %v212 = vld [vmem:[#allocation8 + $0x38] sm:$0xff]
    %v213 = vld [vmem:[#allocation8 + $0x40] sm:$0xff]
    %v214 = vld [vmem:[#allocation8 + $0x48] sm:$0xff]
    %v215 = vld [vmem:[#allocation8 + $0x50] sm:$0xff]
    %v216 = vld [vmem:[#allocation8 + $0x58] sm:$0xff]
    %v217 = vld [vmem:[#allocation8 + $0x60] sm:$0xff]
    %v218 = vld [vmem:[#allocation8 + $0x68] sm:$0xff]
    %v219 = vld [vmem:[#allocation8 + $0x70] sm:$0xff]
    %v220 = vld [vmem:[#allocation8 + $0x78] sm:$0xff]
    %v221 = vld [vmem:[%s6] sm:$0x1]
    %v223 = vlaneseq
    %v224 = vshrl.u32 %v223, 7
    %v225 = vsub.s32 0, %v224
    %v226 = vrot.slane %v221, %v225
    %228 = vmatprep.subr.mxu0 0.0
    %229 = vmatpush1.msra.mxu0 %v205
    %230 = vmatprep.subr.mxu0 0.0
    %231 = vmatpush1.msra.mxu0 %v206
    %232 = vmatprep.subr.mxu0 0.0
    %233 = vmatpush1.msra.mxu0 %v207
    %234 = vmatprep.subr.mxu0 0.0
    %235 = vmatpush1.msra.mxu0 %v208
    %236 = vmatprep.subr.mxu0 0.0
    %237 = vmatpush1.msra.mxu0 %v209
    %238 = vmatprep.subr.mxu0 0.0
    %239 = vmatpush1.msra.mxu0 %v210
    %240 = vmatprep.subr.mxu0 0.0
    %241 = vmatpush1.msra.mxu0 %v211
    %242 = vmatprep.subr.mxu0 0.0
    %243 = vmatpush1.msra.mxu0 %v212
    %244 = vmatprep.subr.mxu0 0.0
    %245 = vmatpush1.msra.mxu0 %v213
    %246 = vmatprep.subr.mxu0 0.0
    %247 = vmatpush1.msra.mxu0 %v214
    %248 = vmatprep.subr.mxu0 0.0
    %249 = vmatpush1.msra.mxu0 %v215
    %250 = vmatprep.subr.mxu0 0.0
    %251 = vmatpush1.msra.mxu0 %v216
    %252 = vmatprep.subr.mxu0 0.0
    %253 = vmatpush1.msra.mxu0 %v217
    %254 = vmatprep.subr.mxu0 0.0
    %255 = vmatpush1.msra.mxu0 %v218
    %256 = vmatprep.subr.mxu0 0.0
    %257 = vmatpush1.msra.mxu0 %v219
    %258 = vmatprep.subr.mxu0 0.0
    %259 = vmatpush1.msra.mxu0 %v220
    %260 = vmatprep.subr.mxu0 0.0
    %261 = vmatpush1.msra.mxu0 0.0
    %262 = vmatprep.subr.mxu0 0.0
    %263 = vmatpush1.msra.mxu0 0.0
    %264 = vmatprep.subr.mxu0 0.0
    %265 = vmatpush1.msra.mxu0 0.0
    %266 = vmatprep.subr.mxu0 0.0
    %267 = vmatpush1.msra.mxu0 0.0
    %268 = vmatprep.subr.mxu0 0.0
    %269 = vmatpush1.msra.mxu0 0.0
    %270 = vmatprep.subr.mxu0 0.0
    %271 = vmatpush1.msra.mxu0 0.0
    %272 = vmatprep.subr.mxu0 0.0
    %273 = vmatpush1.msra.mxu0 0.0
    %274 = vmatprep.subr.mxu0 0.0
    %275 = vmatpush1.msra.mxu0 0.0
    %276 = vmatprep.subr.mxu0 0.0
    %277 = vmatpush1.msra.mxu0 0.0
    %278 = vmatprep.subr.mxu0 0.0
    %279 = vmatpush1.msra.mxu0 0.0
    %280 = vmatprep.subr.mxu0 0.0
    %281 = vmatpush1.msra.mxu0 0.0
    %282 = vmatprep.subr.mxu0 0.0
    %283 = vmatpush1.msra.mxu0 0.0
    %284 = vmatprep.subr.mxu0 0.0
    %285 = vmatpush1.msra.mxu0 0.0
    %286 = vmatprep.subr.mxu0 0.0
    %287 = vmatpush1.msra.mxu0 0.0
    %288 = vmatprep.subr.mxu0 0.0
    %289 = vmatpush1.msra.mxu0 0.0
    %290 = vmatprep.subr.mxu0 0.0
    %291 = vmatpush1.msra.mxu0 0.0
    %292 = vmatprep.mubr.f32.mxu0 0.0
    %293 = vmatmul.mubr.f32.gmra.mrb[0].mxu0 %v101
    %v294 = vpop.f32.mrb[0].mxu0
    %v295 = vadd.f32 %v226, %v294
    %v296 = vpop.f32.mrb[0].mxu0
    %297 = vmatprep.mubr.f32.mxu0 0.0
    %298 = vmatmul.mubr.f32.gmra.mrb[0].mxu0 %v102
    %v299 = vpop.f32.mrb[0].mxu0
    %v300 = vadd.f32 %v226, %v299
    %v301 = vpop.f32.mrb[0].mxu0
    %302 = vmatprep.mubr.f32.mxu0 0.0
    %303 = vmatmul.mubr.f32.gmra.mrb[0].mxu0 %v103
    %v304 = vpop.f32.mrb[0].mxu0
    %v305 = vadd.f32 %v226, %v304
    %v306 = vpop.f32.mrb[0].mxu0
    %307 = vmatprep.mubr.f32.mxu0 0.0
    %308 = vmatmul.mubr.f32.gmra.mrb[0].mxu0 %v104
    %v309 = vpop.f32.mrb[0].mxu0
    %v310 = vadd.f32 %v226, %v309
    %v311 = vpop.f32.mrb[0].mxu0
    %312 = vdwg.mxu0
    %v313 = vld [vmem:[#allocation10] sm:$0xff]
    %v314 = vld [vmem:[#allocation10 + $0x8] sm:$0xff]
    %v315 = vld [vmem:[#allocation10 + $0x10] sm:$0xff]
    %v316 = vld [vmem:[#allocation10 + $0x18] sm:$0xff]
    %v317 = vld [vmem:[#allocation10 + $0x20] sm:$0xff]
    %v318 = vld [vmem:[#allocation10 + $0x28] sm:$0xff]
    %v319 = vld [vmem:[#allocation10 + $0x30] sm:$0xff]
    %v320 = vld [vmem:[#allocation10 + $0x38] sm:$0xff]
    %v321 = vld [vmem:[#allocation10 + $0x40] sm:$0xff]
    %v322 = vld [vmem:[#allocation10 + $0x48] sm:$0xff]
    %v323 = vld [vmem:[#allocation10 + $0x50] sm:$0xff]
    %v324 = vld [vmem:[#allocation10 + $0x58] sm:$0xff]
    %v325 = vld [vmem:[#allocation10 + $0x60] sm:$0xff]
    %v326 = vld [vmem:[#allocation10 + $0x68] sm:$0xff]
    %v327 = vld [vmem:[#allocation10 + $0x70] sm:$0xff]
    %v328 = vld [vmem:[#allocation10 + $0x78] sm:$0xff]
    %v329 = vld [vmem:[%s8] sm:$0x1]
    %v331 = vlaneseq
    %v332 = vshrl.u32 %v331, 7
    %v333 = vsub.s32 0, %v332
    %v334 = vrot.slane %v329, %v333
    %336 = vmatprep.subr.mxu0 0.0
    %337 = vmatpush1.msra.mxu0 %v313
    %338 = vmatprep.subr.mxu0 0.0
    %339 = vmatpush1.msra.mxu0 %v314
    %340 = vmatprep.subr.mxu0 0.0
    %341 = vmatpush1.msra.mxu0 %v315
    %342 = vmatprep.subr.mxu0 0.0
    %343 = vmatpush1.msra.mxu0 %v316
    %344 = vmatprep.subr.mxu0 0.0
    %345 = vmatpush1.msra.mxu0 %v317
    %346 = vmatprep.subr.mxu0 0.0
    %347 = vmatpush1.msra.mxu0 %v318
    %348 = vmatprep.subr.mxu0 0.0
    %349 = vmatpush1.msra.mxu0 %v319
    %350 = vmatprep.subr.mxu0 0.0
    %351 = vmatpush1.msra.mxu0 %v320
    %352 = vmatprep.subr.mxu0 0.0
    %353 = vmatpush1.msra.mxu0 %v321
    %354 = vmatprep.subr.mxu0 0.0
    %355 = vmatpush1.msra.mxu0 %v322
    %356 = vmatprep.subr.mxu0 0.0
    %357 = vmatpush1.msra.mxu0 %v323
    %358 = vmatprep.subr.mxu0 0.0
    %359 = vmatpush1.msra.mxu0 %v324
    %360 = vmatprep.subr.mxu0 0.0
    %361 = vmatpush1.msra.mxu0 %v325
    %362 = vmatprep.subr.mxu0 0.0
    %363 = vmatpush1.msra.mxu0 %v326
    %364 = vmatprep.subr.mxu0 0.0
    %365 = vmatpush1.msra.mxu0 %v327
    %366 = vmatprep.subr.mxu0 0.0
    %367 = vmatpush1.msra.mxu0 %v328
    %368 = vmatprep.subr.mxu0 0.0
    %369 = vmatpush1.msra.mxu0 0.0
    %370 = vmatprep.subr.mxu0 0.0
    %371 = vmatpush1.msra.mxu0 0.0
    %372 = vmatprep.subr.mxu0 0.0
    %373 = vmatpush1.msra.mxu0 0.0
    %374 = vmatprep.subr.mxu0 0.0
    %375 = vmatpush1.msra.mxu0 0.0
    %376 = vmatprep.subr.mxu0 0.0
    %377 = vmatpush1.msra.mxu0 0.0
    %378 = vmatprep.subr.mxu0 0.0
    %379 = vmatpush1.msra.mxu0 0.0
    %380 = vmatprep.subr.mxu0 0.0
    %381 = vmatpush1.msra.mxu0 0.0
    %382 = vmatprep.subr.mxu0 0.0
    %383 = vmatpush1.msra.mxu0 0.0
    %384 = vmatprep.subr.mxu0 0.0
    %385 = vmatpush1.msra.mxu0 0.0
    %386 = vmatprep.subr.mxu0 0.0
    %387 = vmatpush1.msra.mxu0 0.0
    %388 = vmatprep.subr.mxu0 0.0
    %389 = vmatpush1.msra.mxu0 0.0
    %390 = vmatprep.subr.mxu0 0.0
    %391 = vmatpush1.msra.mxu0 0.0
    %392 = vmatprep.subr.mxu0 0.0
    %393 = vmatpush1.msra.mxu0 0.0
    %394 = vmatprep.subr.mxu0 0.0
    %395 = vmatpush1.msra.mxu0 0.0
    %396 = vmatprep.subr.mxu0 0.0
    %397 = vmatpush1.msra.mxu0 0.0
    %398 = vmatprep.subr.mxu0 0.0
    %399 = vmatpush1.msra.mxu0 0.0
    %400 = vmatprep.mubr.f32.mxu0 0.0
    %401 = vmatmul.mubr.f32.gmra.mrb[0].mxu0 %v101
    %v402 = vpop.f32.mrb[0].mxu0
    %v403 = vadd.f32 %v334, %v402
    %v404 = vpop.f32.mrb[0].mxu0
    %405 = vmatprep.mubr.f32.mxu0 0.0
    %406 = vmatmul.mubr.f32.gmra.mrb[0].mxu0 %v102
    %v407 = vpop.f32.mrb[0].mxu0
    %v408 = vadd.f32 %v334, %v407
    %v409 = vpop.f32.mrb[0].mxu0
    %410 = vmatprep.mubr.f32.mxu0 0.0
    %411 = vmatmul.mubr.f32.gmra.mrb[0].mxu0 %v103
    %v412 = vpop.f32.mrb[0].mxu0
    %v413 = vadd.f32 %v334, %v412
    %v414 = vpop.f32.mrb[0].mxu0
    %415 = vmatprep.mubr.f32.mxu0 0.0
    %416 = vmatmul.mubr.f32.gmra.mrb[0].mxu0 %v104
    %v417 = vpop.f32.mrb[0].mxu0
    %v418 = vadd.f32 %v334, %v417
    %v419 = vpop.f32.mrb[0].mxu0
    %420 = vdwg.mxu0
    %v421 = vld [vmem:[%s2] sm:$0x1]
    %v422 = vld [vmem:[%s2 + $0x1] sm:$0x1]
    %v425 = vlaneseq
    %v426 = vshrl.u32 %v425, 7
    %v427 = vsub.s32 0, %v426
    %v428 = vrot.slane %v421, %v427
    %v429 = vlaneseq
    %v430 = vshrl.u32 %v429, 7
    %v431 = vsub.s32 0, %v430
    %v432 = vrot.slane %v422, %v431
    %435 = vmatprep.subr.mxu0 0.0
    %436 = vmatpush1.xpose.msra.mxu0 %v295
    %437 = vmatprep.subr.mxu0 0.0
    %438 = vmatpush1.xpose.msra.mxu0 %v300
    %439 = vmatprep.subr.mxu0 0.0
    %440 = vmatpush1.xpose.msra.mxu0 0.0
    %441 = vmatprep.subr.mxu0 0.0
    %442 = vmatpush1.xpose.msra.mxu0 0.0
    %443 = vmatprep.subr.mxu0 0.0
    %444 = vmatpush1.xpose.msra.mxu0 0.0
    %445 = vmatprep.subr.mxu0 0.0
    %446 = vmatpush1.xpose.msra.mxu0 0.0
    %447 = vmatprep.subr.mxu0 0.0
    %448 = vmatpush1.xpose.msra.mxu0 0.0
    %449 = vmatprep.subr.mxu0 0.0
    %450 = vmatpush1.xpose.msra.mxu0 0.0
    %451 = vmatprep.subr.mxu0 0.0
    %452 = vmatpush1.xpose.msra.mxu0 0.0
    %453 = vmatprep.subr.mxu0 0.0
    %454 = vmatpush1.xpose.msra.mxu0 0.0
    %455 = vmatprep.subr.mxu0 0.0
    %456 = vmatpush1.xpose.msra.mxu0 0.0
    %457 = vmatprep.subr.mxu0 0.0
    %458 = vmatpush1.xpose.msra.mxu0 0.0
    %459 = vmatprep.subr.mxu0 0.0
    %460 = vmatpush1.xpose.msra.mxu0 0.0
    %461 = vmatprep.subr.mxu0 0.0
    %462 = vmatpush1.xpose.msra.mxu0 0.0
    %463 = vmatprep.subr.mxu0 0.0
    %464 = vmatpush1.xpose.msra.mxu0 0.0
    %465 = vmatprep.subr.mxu0 0.0
    %466 = vmatpush1.xpose.msra.mxu0 0.0
    %467 = vmatprep.subr.mxu0 0.0
    %468 = vmatpush1.xpose.msra.mxu0 0.0
    %469 = vmatprep.subr.mxu0 0.0
    %470 = vmatpush1.xpose.msra.mxu0 0.0
    %471 = vmatprep.subr.mxu0 0.0
    %472 = vmatpush1.xpose.msra.mxu0 0.0
    %473 = vmatprep.subr.mxu0 0.0
    %474 = vmatpush1.xpose.msra.mxu0 0.0
    %475 = vmatprep.subr.mxu0 0.0
    %476 = vmatpush1.xpose.msra.mxu0 0.0
    %477 = vmatprep.subr.mxu0 0.0
    %478 = vmatpush1.xpose.msra.mxu0 0.0
    %479 = vmatprep.subr.mxu0 0.0
    %480 = vmatpush1.xpose.msra.mxu0 0.0
    %481 = vmatprep.subr.mxu0 0.0
    %482 = vmatpush1.xpose.msra.mxu0 0.0
    %483 = vmatprep.subr.mxu0 0.0
    %484 = vmatpush1.xpose.msra.mxu0 0.0
    %485 = vmatprep.subr.mxu0 0.0
    %486 = vmatpush1.xpose.msra.mxu0 0.0
    %487 = vmatprep.subr.mxu0 0.0
    %488 = vmatpush1.xpose.msra.mxu0 0.0
    %489 = vmatprep.subr.mxu0 0.0
    %490 = vmatpush1.xpose.msra.mxu0 0.0
    %491 = vmatprep.subr.mxu0 0.0
    %492 = vmatpush1.xpose.msra.mxu0 0.0
    %493 = vmatprep.subr.mxu0 0.0
    %494 = vmatpush1.xpose.msra.mxu0 0.0
    %495 = vmatprep.subr.mxu0 0.0
    %496 = vmatpush1.xpose.msra.mxu0 0.0
    %497 = vmatprep.subr.mxu0 0.0
    %498 = vmatpush1.xpose.msra.mxu0 0.0
    %499 = vmatprep.mubr.f32.mxu0 0.0
    %500 = vmatmul.mubr.f32.gmra.mrb[0].mxu0 %v197
    %v501 = vpop.f32.mrb[0].mxu0
    %v502 = vadd.f32 %v428, %v501
    %v503 = vpop.f32.mrb[0].mxu0
    %504 = vdwg.mxu0
    %505 = vmatprep.subr.mxu0 0.0
    %506 = vmatpush1.xpose.msra.mxu0 %v305
    %507 = vmatprep.subr.mxu0 0.0
    %508 = vmatpush1.xpose.msra.mxu0 %v310
    %509 = vmatprep.subr.mxu0 0.0
    %510 = vmatpush1.xpose.msra.mxu0 0.0
    %511 = vmatprep.subr.mxu0 0.0
    %512 = vmatpush1.xpose.msra.mxu0 0.0
    %513 = vmatprep.subr.mxu0 0.0
    %514 = vmatpush1.xpose.msra.mxu0 0.0
    %515 = vmatprep.subr.mxu0 0.0
    %516 = vmatpush1.xpose.msra.mxu0 0.0
    %517 = vmatprep.subr.mxu0 0.0
    %518 = vmatpush1.xpose.msra.mxu0 0.0
    %519 = vmatprep.subr.mxu0 0.0
    %520 = vmatpush1.xpose.msra.mxu0 0.0
    %521 = vmatprep.subr.mxu0 0.0
    %522 = vmatpush1.xpose.msra.mxu0 0.0
    %523 = vmatprep.subr.mxu0 0.0
    %524 = vmatpush1.xpose.msra.mxu0 0.0
    %525 = vmatprep.subr.mxu0 0.0
    %526 = vmatpush1.xpose.msra.mxu0 0.0
    %527 = vmatprep.subr.mxu0 0.0
    %528 = vmatpush1.xpose.msra.mxu0 0.0
    %529 = vmatprep.subr.mxu0 0.0
    %530 = vmatpush1.xpose.msra.mxu0 0.0
    %531 = vmatprep.subr.mxu0 0.0
    %532 = vmatpush1.xpose.msra.mxu0 0.0
    %533 = vmatprep.subr.mxu0 0.0
    %534 = vmatpush1.xpose.msra.mxu0 0.0
    %535 = vmatprep.subr.mxu0 0.0
    %536 = vmatpush1.xpose.msra.mxu0 0.0
    %537 = vmatprep.subr.mxu0 0.0
    %538 = vmatpush1.xpose.msra.mxu0 0.0
    %539 = vmatprep.subr.mxu0 0.0
    %540 = vmatpush1.xpose.msra.mxu0 0.0
    %541 = vmatprep.subr.mxu0 0.0
    %542 = vmatpush1.xpose.msra.mxu0 0.0
    %543 = vmatprep.subr.mxu0 0.0
    %544 = vmatpush1.xpose.msra.mxu0 0.0
    %545 = vmatprep.subr.mxu0 0.0
    %546 = vmatpush1.xpose.msra.mxu0 0.0
    %547 = vmatprep.subr.mxu0 0.0
    %548 = vmatpush1.xpose.msra.mxu0 0.0
    %549 = vmatprep.subr.mxu0 0.0
    %550 = vmatpush1.xpose.msra.mxu0 0.0
    %551 = vmatprep.subr.mxu0 0.0
    %552 = vmatpush1.xpose.msra.mxu0 0.0
    %553 = vmatprep.subr.mxu0 0.0
    %554 = vmatpush1.xpose.msra.mxu0 0.0
    %555 = vmatprep.subr.mxu0 0.0
    %556 = vmatpush1.xpose.msra.mxu0 0.0
    %557 = vmatprep.subr.mxu0 0.0
    %558 = vmatpush1.xpose.msra.mxu0 0.0
    %559 = vmatprep.subr.mxu0 0.0
    %560 = vmatpush1.xpose.msra.mxu0 0.0
    %561 = vmatprep.subr.mxu0 0.0
    %562 = vmatpush1.xpose.msra.mxu0 0.0
    %563 = vmatprep.subr.mxu0 0.0
    %564 = vmatpush1.xpose.msra.mxu0 0.0
    %565 = vmatprep.subr.mxu0 0.0
    %566 = vmatpush1.xpose.msra.mxu0 0.0
    %567 = vmatprep.subr.mxu0 0.0
    %568 = vmatpush1.xpose.msra.mxu0 0.0
    %569 = vmatprep.mubr.f32.mxu0 0.0
    %570 = vmatmul.mubr.f32.gmra.mrb[0].mxu0 %v202
    %v571 = vpop.f32.mrb[0].mxu0
    %v572 = vadd.f32 %v432, %v571
    %v573 = vpop.f32.mrb[0].mxu0
    %574 = vdwg.mxu0
    %vm575 = vcmask 130048
    %v576 = vsel %vm575, %v502, -inf
    %577 = vmax.xlane.f32.xlu0 %v576
    %v578 = vpop.xlane.xlu0 %577
    %v579 = vsel %vm575, %v572, -inf
    %580 = vmax.xlane.f32.xlu0 %v579
    %v581 = vpop.xlane.xlu0 %580
    %v582 = vsub.f32 %v502, %v578
    %v583 = vsub.f32 %v572, %v581
    %v584 = vmul.f32 %v582, 1.442695
    %v585 = vpow.pop %v584
    %v586 = vmul.f32 %v583, 1.442695
    %v587 = vpow.pop %v586
    %v588 = vsel %vm575, %v585, 0.0
    %589 = vadd.xlane.f32.xlu0 %v588
    %v590 = vpop.xlane.xlu0 %589
    %v591 = vsel %vm575, %v587, 0.0
    %592 = vadd.xlane.f32.xlu0 %v591
    %v593 = vpop.xlane.xlu0 %592
    %v594 = vrcp.pop %v590
    %v595 = vrcp.pop %v593
    %v596 = vmul.f32 %v585, %v594
    %v597 = vmul.f32 %v587, %v595
    %v599 = vsel %vm575, %v596, 0
    %601 = vmatprep.subr.mxu0 0.0
    %602 = vmatpush1.msra.mxu0 %v403
    %603 = vmatprep.subr.mxu0 0.0
    %604 = vmatpush1.msra.mxu0 %v408
    %605 = vmatprep.subr.mxu0 0.0
    %606 = vmatpush1.msra.mxu0 0.0
    %607 = vmatprep.subr.mxu0 0.0
    %608 = vmatpush1.msra.mxu0 0.0
    %609 = vmatprep.subr.mxu0 0.0
    %610 = vmatpush1.msra.mxu0 0.0
    %611 = vmatprep.subr.mxu0 0.0
    %612 = vmatpush1.msra.mxu0 0.0
    %613 = vmatprep.subr.mxu0 0.0
    %614 = vmatpush1.msra.mxu0 0.0
    %615 = vmatprep.subr.mxu0 0.0
    %616 = vmatpush1.msra.mxu0 0.0
    %617 = vmatprep.subr.mxu0 0.0
    %618 = vmatpush1.msra.mxu0 0.0
    %619 = vmatprep.subr.mxu0 0.0
    %620 = vmatpush1.msra.mxu0 0.0
    %621 = vmatprep.subr.mxu0 0.0
    %622 = vmatpush1.msra.mxu0 0.0
    %623 = vmatprep.subr.mxu0 0.0
    %624 = vmatpush1.msra.mxu0 0.0
    %625 = vmatprep.subr.mxu0 0.0
    %626 = vmatpush1.msra.mxu0 0.0
    %627 = vmatprep.subr.mxu0 0.0
    %628 = vmatpush1.msra.mxu0 0.0
    %629 = vmatprep.subr.mxu0 0.0
    %630 = vmatpush1.msra.mxu0 0.0
    %631 = vmatprep.subr.mxu0 0.0
    %632 = vmatpush1.msra.mxu0 0.0
    %633 = vmatprep.subr.mxu0 0.0
    %634 = vmatpush1.msra.mxu0 0.0
    %635 = vmatprep.subr.mxu0 0.0
    %636 = vmatpush1.msra.mxu0 0.0
    %637 = vmatprep.subr.mxu0 0.0
    %638 = vmatpush1.msra.mxu0 0.0
    %639 = vmatprep.subr.mxu0 0.0
    %640 = vmatpush1.msra.mxu0 0.0
    %641 = vmatprep.subr.mxu0 0.0
    %642 = vmatpush1.msra.mxu0 0.0
    %643 = vmatprep.subr.mxu0 0.0
    %644 = vmatpush1.msra.mxu0 0.0
    %645 = vmatprep.subr.mxu0 0.0
    %646 = vmatpush1.msra.mxu0 0.0
    %647 = vmatprep.subr.mxu0 0.0
    %648 = vmatpush1.msra.mxu0 0.0
    %649 = vmatprep.subr.mxu0 0.0
    %650 = vmatpush1.msra.mxu0 0.0
    %651 = vmatprep.subr.mxu0 0.0
    %652 = vmatpush1.msra.mxu0 0.0
    %653 = vmatprep.subr.mxu0 0.0
    %654 = vmatpush1.msra.mxu0 0.0
    %655 = vmatprep.subr.mxu0 0.0
    %656 = vmatpush1.msra.mxu0 0.0
    %657 = vmatprep.subr.mxu0 0.0
    %658 = vmatpush1.msra.mxu0 0.0
    %659 = vmatprep.subr.mxu0 0.0
    %660 = vmatpush1.msra.mxu0 0.0
    %661 = vmatprep.subr.mxu0 0.0
    %662 = vmatpush1.msra.mxu0 0.0
    %663 = vmatprep.subr.mxu0 0.0
    %664 = vmatpush1.msra.mxu0 0.0
    %665 = vmatprep.mubr.f32.mxu0 0.0
    %666 = vmatmul.mubr.f32.gmra.mrb[0].mxu0 %v599
    %v667 = vpop.f32.mrb[0].mxu0
    %v668 = vadd.f32 0.0, %v667
    %v669 = vpop.f32.mrb[0].mxu0
    %670 = vdwg.mxu0
    %v672 = vsel %vm575, %v597, 0
    %674 = vmatprep.subr.mxu0 0.0
    %675 = vmatpush1.msra.mxu0 %v413
    %676 = vmatprep.subr.mxu0 0.0
    %677 = vmatpush1.msra.mxu0 %v418
    %678 = vmatprep.subr.mxu0 0.0
    %679 = vmatpush1.msra.mxu0 0.0
    %680 = vmatprep.subr.mxu0 0.0
    %681 = vmatpush1.msra.mxu0 0.0
    %682 = vmatprep.subr.mxu0 0.0
    %683 = vmatpush1.msra.mxu0 0.0
    %684 = vmatprep.subr.mxu0 0.0
    %685 = vmatpush1.msra.mxu0 0.0
    %686 = vmatprep.subr.mxu0 0.0
    %687 = vmatpush1.msra.mxu0 0.0
    %688 = vmatprep.subr.mxu0 0.0
    %689 = vmatpush1.msra.mxu0 0.0
    %690 = vmatprep.subr.mxu0 0.0
    %691 = vmatpush1.msra.mxu0 0.0
    %692 = vmatprep.subr.mxu0 0.0
    %693 = vmatpush1.msra.mxu0 0.0
    %694 = vmatprep.subr.mxu0 0.0
    %695 = vmatpush1.msra.mxu0 0.0
    %696 = vmatprep.subr.mxu0 0.0
    %697 = vmatpush1.msra.mxu0 0.0
    %698 = vmatprep.subr.mxu0 0.0
    %699 = vmatpush1.msra.mxu0 0.0
    %700 = vmatprep.subr.mxu0 0.0
    %701 = vmatpush1.msra.mxu0 0.0
    %702 = vmatprep.subr.mxu0 0.0
    %703 = vmatpush1.msra.mxu0 0.0
    %704 = vmatprep.subr.mxu0 0.0
    %705 = vmatpush1.msra.mxu0 0.0
    %706 = vmatprep.subr.mxu0 0.0
    %707 = vmatpush1.msra.mxu0 0.0
    %708 = vmatprep.subr.mxu0 0.0
    %709 = vmatpush1.msra.mxu0 0.0
    %710 = vmatprep.subr.mxu0 0.0
    %711 = vmatpush1.msra.mxu0 0.0
    %712 = vmatprep.subr.mxu0 0.0
    %713 = vmatpush1.msra.mxu0 0.0
    %714 = vmatprep.subr.mxu0 0.0
    %715 = vmatpush1.msra.mxu0 0.0
    %716 = vmatprep.subr.mxu0 0.0
    %717 = vmatpush1.msra.mxu0 0.0
    %718 = vmatprep.subr.mxu0 0.0
    %719 = vmatpush1.msra.mxu0 0.0
    %720 = vmatprep.subr.mxu0 0.0
    %721 = vmatpush1.msra.mxu0 0.0
    %722 = vmatprep.subr.mxu0 0.0
    %723 = vmatpush1.msra.mxu0 0.0
    %724 = vmatprep.subr.mxu0 0.0
    %725 = vmatpush1.msra.mxu0 0.0
    %726 = vmatprep.subr.mxu0 0.0
    %727 = vmatpush1.msra.mxu0 0.0
    %728 = vmatprep.subr.mxu0 0.0
    %729 = vmatpush1.msra.mxu0 0.0
    %730 = vmatprep.subr.mxu0 0.0
    %731 = vmatpush1.msra.mxu0 0.0
    %732 = vmatprep.subr.mxu0 0.0
    %733 = vmatpush1.msra.mxu0 0.0
    %734 = vmatprep.subr.mxu0 0.0
    %735 = vmatpush1.msra.mxu0 0.0
    %736 = vmatprep.subr.mxu0 0.0
    %737 = vmatpush1.msra.mxu0 0.0
    %738 = vmatprep.mubr.f32.mxu0 0.0
    %739 = vmatmul.mubr.f32.gmra.mrb[0].mxu0 %v672
    %v740 = vpop.f32.mrb[0].mxu0
    %v741 = vadd.f32 0.0, %v740
    %v742 = vpop.f32.mrb[0].mxu0
    %743 = vdwg.mxu0
    %744 = vst [vmem:[#allocation11] sm:$0xff] %v668
    %745 = vst [vmem:[#allocation11 + $0x8] sm:$0xff] %v741
    // Predicated region
    $region58: #{tpu_custom_call.1} parent=1 // pred_check
      _
    $region59: #{tpu_custom_call.1} parent=1 // pred_check_branch
      %747 = sbr.rel (0) target = $region61
    $region60: #{tpu_custom_call.1} parent=1 // pred_region
      %s749 = ssub.s32 256, 256
      %750 = vsyncadd [#allocation4], %s749
      %s751 = sshll.u32 [#allocation11], 4
      %s752 = int_to_ptr.vmem [resolvable:$true] %s751
      %757 = dma.vmem_to_hbm [thread:$0]  %s752, 256, %s9, [#allocation4], 128, 128, 8
    $region61: #{tpu_custom_call.1} parent=1 // pred_fallthru
      _
    // Predicated region
    $region62: #{tpu_custom_call.1} parent=1 // pred_check
      _
    $region63: #{tpu_custom_call.1} parent=1 // pred_check_branch
      %759 = sbr.rel (0) target = $region65
    $region64: #{tpu_custom_call.1} parent=1 // pred_region
      %760 = dma.done [#allocation4], 256
    $region65: #{tpu_custom_call.1} parent=1 // pred_fallthru
      _
    %761 = vsyncpa [#allocation3], 1
    %762 = vsyncpa [#allocation6], 1
    %763 = vsyncpa [#allocation9], 1
    %764 = vsyncpa [#allocation4], 1

// kernel: tpu_custom_call.1
$region0: #{tpu_custom_call.1}
  #allocation0 [shape = 'u32[]', space=smem, size = 0x4, offset = 0x4, fixed_abs, tag = 'smem constant byte address 0x4 - core index']
  #allocation1 [shape = 'u32[144,128]{1,0:T(1,128)}', space=vmem, size = 0x12000, scoped, tag = 'internal scratch']
  %s0 = inlined_call_operand.hbm [shape: f32[2,16,128], index: 0, kind: input, shape index: {}]
  %s1 = inlined_call_operand.hbm [shape: f32[2,8,128], index: 1, kind: input, shape index: {}]
  %s2 = inlined_call_operand.vmem [shape: f32[2,1,16], index: 2, kind: input, shape index: {}]
  %s3 = inlined_call_operand.hbm [shape: f32[128,128], index: 3, kind: input, shape index: {}]
  %s4 = inlined_call_operand.vmem [shape: f32[1,128], index: 4, kind: input, shape index: {}]
  %s5 = inlined_call_operand.hbm [shape: f32[128,128], index: 5, kind: input, shape index: {}]
  %s6 = inlined_call_operand.vmem [shape: f32[1,128], index: 6, kind: input, shape index: {}]
  %s7 = inlined_call_operand.hbm [shape: f32[128,128], index: 7, kind: input, shape index: {}]
  %s8 = inlined_call_operand.vmem [shape: f32[1,128], index: 8, kind: input, shape index: {}]
  %s9 = inlined_call_operand.hbm [shape: f32[2,8,128], index: 9, kind: output, shape index: {}]
  %s10 = sld [smem:[#allocation0]]
  $region66: #{tpu_custom_call.1} parent=0
    _
  %s12 = ssub.s32 1, %s10
  %s13 = scalar_select 0, %s12, %s10
  $region1: #{tpu_custom_call.1} parent=0
    #allocation2 [shape = 'u8[16384]{0}', space=vmem, size = 0x4000, scoped, tag = 'input window, operand 0, single buffered']
    #allocation3 [shape = 's32[1]{0}', space=sflag, size = 0x4, scoped, tag = 'scoped memory for tpu_custom_call.1']
    #allocation4 [shape = 's32[1]{0}', space=sflag, size = 0x4, scoped, tag = 'scoped memory for tpu_custom_call.1']
    #allocation5 [shape = 'u8[8192]{0}', space=vmem, size = 0x2000, scoped, tag = 'input window, operand 1, single buffered']
    #allocation6 [shape = 's32[1]{0}', space=sflag, size = 0x4, scoped, tag = 'scoped memory for tpu_custom_call.1']
    #allocation7 [shape = 'u8[65536]{0}', space=vmem, size = 0x10000, scoped, tag = 'input window, operand 3, single buffered']
    #allocation8 [shape = 'u8[65536]{0}', space=vmem, size = 0x10000, scoped, tag = 'input window, operand 5, single buffered']
    #allocation9 [shape = 's32[1]{0}', space=sflag, size = 0x4, scoped, tag = 'scoped memory for tpu_custom_call.1']
    #allocation10 [shape = 'u8[65536]{0}', space=vmem, size = 0x10000, scoped, tag = 'input window, operand 7, single buffered']
    #allocation11 [shape = 'u8[8192]{0}', space=vmem, size = 0x2000, scoped, tag = 'output window, operand 0, single buffered']
    %14 = vsyncpa [#allocation3], 0
    %15 = vsyncpa [#allocation6], 0
    %16 = vsyncpa [#allocation9], 0
    %17 = vsyncpa [#allocation4], 0
    // Predicated region
    $region2: #{tpu_custom_call.1} parent=1 // pred_check
      _
    $region3: #{tpu_custom_call.1} parent=1 // pred_check_branch
      %19 = sbr.rel (0) target = $region5
    $region4: #{tpu_custom_call.1} parent=1 // pred_region
      %s21 = ssub.s32 512, 512
      %22 = vsyncadd [#allocation3], %s21
      %s23 = sshll.u32 [#allocation2], 4
      %s24 = int_to_ptr.vmem [resolvable:$true] %s23
      %29 = dma.hbm_to_vmem [thread:$0]  %s0, 512, %s24, [#allocation3], 128, 128, 8
    $region5: #{tpu_custom_call.1} parent=1 // pred_fallthru
      _
    // Predicated region
    $region6: #{tpu_custom_call.1} parent=1 // pred_check
      _
    $region7: #{tpu_custom_call.1} parent=1 // pred_check_branch
      %31 = sbr.rel (0) target = $region9
    $region8: #{tpu_custom_call.1} parent=1 // pred_region
      %s33 = ssub.s32 256, 256
      %34 = vsyncadd [#allocation6], %s33
      %s35 = sshll.u32 [#allocation5], 4
      %s36 = int_to_ptr.vmem [resolvable:$true] %s35
      %41 = dma.hbm_to_vmem [thread:$0]  %s1, 256, %s36, [#allocation6], 128, 128, 8
    $region9: #{tpu_custom_call.1} parent=1 // pred_fallthru
      _
    // Predicated region
    $region10: #{tpu_custom_call.1} parent=1 // pred_check
      _
    $region11: #{tpu_custom_call.1} parent=1 // pred_check_branch
      %43 = sbr.rel (0) target = $region13
    $region12: #{tpu_custom_call.1} parent=1 // pred_region
      _
    $region13: #{tpu_custom_call.1} parent=1 // pred_fallthru
      _
    // Predicated region
    $region14: #{tpu_custom_call.1} parent=1 // pred_check
      _
    $region15: #{tpu_custom_call.1} parent=1 // pred_check_branch
      %45 = sbr.rel (0) target = $region17
    $region16: #{tpu_custom_call.1} parent=1 // pred_region
      %s47 = ssub.s32 2048, 2048
      %48 = vsyncadd [#allocation6], %s47
      %s49 = sshll.u32 [#allocation7], 4
      %s50 = int_to_ptr.vmem [resolvable:$true] %s49
      %55 = dma.hbm_to_vmem [thread:$0]  %s3, 2048, %s50, [#allocation6], 128, 128, 8
    $region17: #{tpu_custom_call.1} parent=1 // pred_fallthru
      _
    // Predicated region
    $region18: #{tpu_custom_call.1} parent=1 // pred_check
      _
    $region19: #{tpu_custom_call.1} parent=1 // pred_check_branch
      %57 = sbr.rel (0) target = $region21
    $region20: #{tpu_custom_call.1} parent=1 // pred_region
      _
    $region21: #{tpu_custom_call.1} parent=1 // pred_fallthru
      _
    // Predicated region
    $region22: #{tpu_custom_call.1} parent=1 // pred_check
      _
    $region23: #{tpu_custom_call.1} parent=1 // pred_check_branch
      %59 = sbr.rel (0) target = $region25
    $region24: #{tpu_custom_call.1} parent=1 // pred_region
      %s61 = ssub.s32 2048, 2048
      %62 = vsyncadd [#allocation9], %s61
      %s63 = sshll.u32 [#allocation8], 4
      %s64 = int_to_ptr.vmem [resolvable:$true] %s63
      %69 = dma.hbm_to_vmem [thread:$0]  %s5, 2048, %s64, [#allocation9], 128, 128, 8
    $region25: #{tpu_custom_call.1} parent=1 // pred_fallthru
      _
    // Predicated region
    $region26: #{tpu_custom_call.1} parent=1 // pred_check
      _
    $region27: #{tpu_custom_call.1} parent=1 // pred_check_branch
      %71 = sbr.rel (0) target = $region29
    $region28: #{tpu_custom_call.1} parent=1 // pred_region
      _
    $region29: #{tpu_custom_call.1} parent=1 // pred_fallthru
      _
    // Predicated region
    $region30: #{tpu_custom_call.1} parent=1 // pred_check
      _
    $region31: #{tpu_custom_call.1} parent=1 // pred_check_branch
      %73 = sbr.rel (0) target = $region33
    $region32: #{tpu_custom_call.1} parent=1 // pred_region
      %s75 = ssub.s32 2048, 2048
      %76 = vsyncadd [#allocation9], %s75
      %s77 = sshll.u32 [#allocation10], 4
      %s78 = int_to_ptr.vmem [resolvable:$true] %s77
      %83 = dma.hbm_to_vmem [thread:$0]  %s7, 2048, %s78, [#allocation9], 128, 128, 8
    $region33: #{tpu_custom_call.1} parent=1 // pred_fallthru
      _
    // Predicated region
    $region34: #{tpu_custom_call.1} parent=1 // pred_check
      _
    $region35: #{tpu_custom_call.1} parent=1 // pred_check_branch
      %85 = sbr.rel (0) target = $region37
    $region36: #{tpu_custom_call.1} parent=1 // pred_region
      _
    $region37: #{tpu_custom_call.1} parent=1 // pred_fallthru
      _
    // Predicated region
    $region38: #{tpu_custom_call.1} parent=1 // pred_check
      _
    $region39: #{tpu_custom_call.1} parent=1 // pred_check_branch
      %87 = sbr.rel (0) target = $region41
    $region40: #{tpu_custom_call.1} parent=1 // pred_region
      %88 = dma.done [#allocation3], 512
    $region41: #{tpu_custom_call.1} parent=1 // pred_fallthru
      _
    // Predicated region
    $region42: #{tpu_custom_call.1} parent=1 // pred_check
      _
    $region43: #{tpu_custom_call.1} parent=1 // pred_check_branch
      %90 = sbr.rel (0) target = $region45
    $region44: #{tpu_custom_call.1} parent=1 // pred_region
      %91 = dma.done [#allocation6], 256
    $region45: #{tpu_custom_call.1} parent=1 // pred_fallthru
      _
    // Predicated region
    $region46: #{tpu_custom_call.1} parent=1 // pred_check
      _
    $region47: #{tpu_custom_call.1} parent=1 // pred_check_branch
      %93 = sbr.rel (0) target = $region49
    $region48: #{tpu_custom_call.1} parent=1 // pred_region
      %94 = dma.done [#allocation6], 2048
    $region49: #{tpu_custom_call.1} parent=1 // pred_fallthru
      _
    // Predicated region
    $region50: #{tpu_custom_call.1} parent=1 // pred_check
      _
    $region51: #{tpu_custom_call.1} parent=1 // pred_check_branch
      %96 = sbr.rel (0) target = $region53
    $region52: #{tpu_custom_call.1} parent=1 // pred_region
      %97 = dma.done [#allocation9], 2048
    $region53: #{tpu_custom_call.1} parent=1 // pred_fallthru
      _
    // Predicated region
    $region54: #{tpu_custom_call.1} parent=1 // pred_check
      _
    $region55: #{tpu_custom_call.1} parent=1 // pred_check_branch
      %99 = sbr.rel (0) target = $region57
    $region56: #{tpu_custom_call.1} parent=1 // pred_region
      %100 = dma.done [#allocation9], 2048
    $region57: #{tpu_custom_call.1} parent=1 // pred_fallthru
      _
    %v101 = vld [vmem:[#allocation2] sm:$0xff]
    %v102 = vld [vmem:[#allocation2 + $0x8] sm:$0xff]
    %v103 = vld [vmem:[#allocation2 + $0x10] sm:$0xff]
    %v104 = vld [vmem:[#allocation2 + $0x18] sm:$0xff]
    %v105 = vld [vmem:[#allocation5] sm:$0xff]
    %v106 = vld [vmem:[#allocation5 + $0x8] sm:$0xff]
    %v107 = vld [vmem:[#allocation7] sm:$0xff]
    %v108 = vld [vmem:[#allocation7 + $0x8] sm:$0xff]
    %v109 = vld [vmem:[#allocation7 + $0x10] sm:$0xff]
    %v110 = vld [vmem:[#allocation7 + $0x18] sm:$0xff]
    %v111 = vld [vmem:[#allocation7 + $0x20] sm:$0xff]
    %v112 = vld [vmem:[#allocation7 + $0x28] sm:$0xff]
    %v113 = vld [vmem:[#allocation7 + $0x30] sm:$0xff]
    %v114 = vld [vmem:[#allocation7 + $0x38] sm:$0xff]
    %v115 = vld [vmem:[#allocation7 + $0x40] sm:$0xff]
    %v116 = vld [vmem:[#allocation7 + $0x48] sm:$0xff]
    %v117 = vld [vmem:[#allocation7 + $0x50] sm:$0xff]
    %v118 = vld [vmem:[#allocation7 + $0x58] sm:$0xff]
    %v119 = vld [vmem:[#allocation7 + $0x60] sm:$0xff]
    %v120 = vld [vmem:[#allocation7 + $0x68] sm:$0xff]
    %v121 = vld [vmem:[#allocation7 + $0x70] sm:$0xff]
    %v122 = vld [vmem:[#allocation7 + $0x78] sm:$0xff]
    %v123 = vld [vmem:[%s4] sm:$0x1]
    %v125 = vlaneseq
    %v126 = vshrl.u32 %v125, 7
    %v127 = vsub.s32 0, %v126
    %v128 = vrot.slane %v123, %v127
    %130 = vmatprep.subr.mxu0 0.0
    %131 = vmatpush1.msra.mxu0 %v107
    %132 = vmatprep.subr.mxu0 0.0
    %133 = vmatpush1.msra.mxu0 %v108
    %134 = vmatprep.subr.mxu0 0.0
    %135 = vmatpush1.msra.mxu0 %v109
    %136 = vmatprep.subr.mxu0 0.0
    %137 = vmatpush1.msra.mxu0 %v110
    %138 = vmatprep.subr.mxu0 0.0
    %139 = vmatpush1.msra.mxu0 %v111
    %140 = vmatprep.subr.mxu0 0.0
    %141 = vmatpush1.msra.mxu0 %v112
    %142 = vmatprep.subr.mxu0 0.0
    %143 = vmatpush1.msra.mxu0 %v113
    %144 = vmatprep.subr.mxu0 0.0
    %145 = vmatpush1.msra.mxu0 %v114
    %146 = vmatprep.subr.mxu0 0.0
    %147 = vmatpush1.msra.mxu0 %v115
    %148 = vmatprep.subr.mxu0 0.0
    %149 = vmatpush1.msra.mxu0 %v116
    %150 = vmatprep.subr.mxu0 0.0
    %151 = vmatpush1.msra.mxu0 %v117
    %152 = vmatprep.subr.mxu0 0.0
    %153 = vmatpush1.msra.mxu0 %v118
    %154 = vmatprep.subr.mxu0 0.0
    %155 = vmatpush1.msra.mxu0 %v119
    %156 = vmatprep.subr.mxu0 0.0
    %157 = vmatpush1.msra.mxu0 %v120
    %158 = vmatprep.subr.mxu0 0.0
    %159 = vmatpush1.msra.mxu0 %v121
    %160 = vmatprep.subr.mxu0 0.0
    %161 = vmatpush1.msra.mxu0 %v122
    %162 = vmatprep.subr.mxu0 0.0
    %163 = vmatpush1.msra.mxu0 0.0
    %164 = vmatprep.subr.mxu0 0.0
    %165 = vmatpush1.msra.mxu0 0.0
    %166 = vmatprep.subr.mxu0 0.0
    %167 = vmatpush1.msra.mxu0 0.0
    %168 = vmatprep.subr.mxu0 0.0
    %169 = vmatpush1.msra.mxu0 0.0
    %170 = vmatprep.subr.mxu0 0.0
    %171 = vmatpush1.msra.mxu0 0.0
    %172 = vmatprep.subr.mxu0 0.0
    %173 = vmatpush1.msra.mxu0 0.0
    %174 = vmatprep.subr.mxu0 0.0
    %175 = vmatpush1.msra.mxu0 0.0
    %176 = vmatprep.subr.mxu0 0.0
    %177 = vmatpush1.msra.mxu0 0.0
    %178 = vmatprep.subr.mxu0 0.0
    %179 = vmatpush1.msra.mxu0 0.0
    %180 = vmatprep.subr.mxu0 0.0
    %181 = vmatpush1.msra.mxu0 0.0
    %182 = vmatprep.subr.mxu0 0.0
    %183 = vmatpush1.msra.mxu0 0.0
    %184 = vmatprep.subr.mxu0 0.0
    %185 = vmatpush1.msra.mxu0 0.0
    %186 = vmatprep.subr.mxu0 0.0
    %187 = vmatpush1.msra.mxu0 0.0
    %188 = vmatprep.subr.mxu0 0.0
    %189 = vmatpush1.msra.mxu0 0.0
    %190 = vmatprep.subr.mxu0 0.0
    %191 = vmatpush1.msra.mxu0 0.0
    %192 = vmatprep.subr.mxu0 0.0
    %193 = vmatpush1.msra.mxu0 0.0
    %194 = vmatprep.mubr.f32.mxu0 0.0
    %195 = vmatmul.mubr.f32.gmra.mrb[0].mxu0 %v105
    %v196 = vpop.f32.mrb[0].mxu0
    %v197 = vadd.f32 %v128, %v196
    %v198 = vpop.f32.mrb[0].mxu0
    %199 = vmatprep.mubr.f32.mxu0 0.0
    %200 = vmatmul.mubr.f32.gmra.mrb[0].mxu0 %v106
    %v201 = vpop.f32.mrb[0].mxu0
    %v202 = vadd.f32 %v128, %v201
    %v203 = vpop.f32.mrb[0].mxu0
    %204 = vdwg.mxu0
    %v205 = vld [vmem:[#allocation8] sm:$0xff]
    %v206 = vld [vmem:[#allocation8 + $0x8] sm:$0xff]
    %v207 = vld [vmem:[#allocation8 + $0x10] sm:$0xff]
    %v208 = vld [vmem:[#allocation8 + $0x18] sm:$0xff]
    %v209 = vld [vmem:[#allocation8 + $0x20] sm:$0xff]
    %v210 = vld [vmem:[#allocation8 + $0x28] sm:$0xff]
    %v211 = vld [vmem:[#allocation8 + $0x30] sm:$0xff]
    %v212 = vld [vmem:[#allocation8 + $0x38] sm:$0xff]
    %v213 = vld [vmem:[#allocation8 + $0x40] sm:$0xff]
    %v214 = vld [vmem:[#allocation8 + $0x48] sm:$0xff]
    %v215 = vld [vmem:[#allocation8 + $0x50] sm:$0xff]
    %v216 = vld [vmem:[#allocation8 + $0x58] sm:$0xff]
    %v217 = vld [vmem:[#allocation8 + $0x60] sm:$0xff]
    %v218 = vld [vmem:[#allocation8 + $0x68] sm:$0xff]
    %v219 = vld [vmem:[#allocation8 + $0x70] sm:$0xff]
    %v220 = vld [vmem:[#allocation8 + $0x78] sm:$0xff]
    %v221 = vld [vmem:[%s6] sm:$0x1]
    %v223 = vlaneseq
    %v224 = vshrl.u32 %v223, 7
    %v225 = vsub.s32 0, %v224
    %v226 = vrot.slane %v221, %v225
    %228 = vmatprep.subr.mxu0 0.0
    %229 = vmatpush1.msra.mxu0 %v205
    %230 = vmatprep.subr.mxu0 0.0
    %231 = vmatpush1.msra.mxu0 %v206
    %232 = vmatprep.subr.mxu0 0.0
    %233 = vmatpush1.msra.mxu0 %v207
    %234 = vmatprep.subr.mxu0 0.0
    %235 = vmatpush1.msra.mxu0 %v208
    %236 = vmatprep.subr.mxu0 0.0
    %237 = vmatpush1.msra.mxu0 %v209
    %238 = vmatprep.subr.mxu0 0.0
    %239 = vmatpush1.msra.mxu0 %v210
    %240 = vmatprep.subr.mxu0 0.0
    %241 = vmatpush1.msra.mxu0 %v211
    %242 = vmatprep.subr.mxu0 0.0
    %243 = vmatpush1.msra.mxu0 %v212
    %244 = vmatprep.subr.mxu0 0.0
    %245 = vmatpush1.msra.mxu0 %v213
    %246 = vmatprep.subr.mxu0 0.0
    %247 = vmatpush1.msra.mxu0 %v214
    %248 = vmatprep.subr.mxu0 0.0
    %249 = vmatpush1.msra.mxu0 %v215
    %250 = vmatprep.subr.mxu0 0.0
    %251 = vmatpush1.msra.mxu0 %v216
    %252 = vmatprep.subr.mxu0 0.0
    %253 = vmatpush1.msra.mxu0 %v217
    %254 = vmatprep.subr.mxu0 0.0
    %255 = vmatpush1.msra.mxu0 %v218
    %256 = vmatprep.subr.mxu0 0.0
    %257 = vmatpush1.msra.mxu0 %v219
    %258 = vmatprep.subr.mxu0 0.0
    %259 = vmatpush1.msra.mxu0 %v220
    %260 = vmatprep.subr.mxu0 0.0
    %261 = vmatpush1.msra.mxu0 0.0
    %262 = vmatprep.subr.mxu0 0.0
    %263 = vmatpush1.msra.mxu0 0.0
    %264 = vmatprep.subr.mxu0 0.0
    %265 = vmatpush1.msra.mxu0 0.0
    %266 = vmatprep.subr.mxu0 0.0
    %267 = vmatpush1.msra.mxu0 0.0
    %268 = vmatprep.subr.mxu0 0.0
    %269 = vmatpush1.msra.mxu0 0.0
    %270 = vmatprep.subr.mxu0 0.0
    %271 = vmatpush1.msra.mxu0 0.0
    %272 = vmatprep.subr.mxu0 0.0
    %273 = vmatpush1.msra.mxu0 0.0
    %274 = vmatprep.subr.mxu0 0.0
    %275 = vmatpush1.msra.mxu0 0.0
    %276 = vmatprep.subr.mxu0 0.0
    %277 = vmatpush1.msra.mxu0 0.0
    %278 = vmatprep.subr.mxu0 0.0
    %279 = vmatpush1.msra.mxu0 0.0
    %280 = vmatprep.subr.mxu0 0.0
    %281 = vmatpush1.msra.mxu0 0.0
    %282 = vmatprep.subr.mxu0 0.0
    %283 = vmatpush1.msra.mxu0 0.0
    %284 = vmatprep.subr.mxu0 0.0
    %285 = vmatpush1.msra.mxu0 0.0
    %286 = vmatprep.subr.mxu0 0.0
    %287 = vmatpush1.msra.mxu0 0.0
    %288 = vmatprep.subr.mxu0 0.0
    %289 = vmatpush1.msra.mxu0 0.0
    %290 = vmatprep.subr.mxu0 0.0
    %291 = vmatpush1.msra.mxu0 0.0
    %292 = vmatprep.mubr.f32.mxu0 0.0
    %293 = vmatmul.mubr.f32.gmra.mrb[0].mxu0 %v101
    %v294 = vpop.f32.mrb[0].mxu0
    %v295 = vadd.f32 %v226, %v294
    %v296 = vpop.f32.mrb[0].mxu0
    %297 = vmatprep.mubr.f32.mxu0 0.0
    %298 = vmatmul.mubr.f32.gmra.mrb[0].mxu0 %v102
    %v299 = vpop.f32.mrb[0].mxu0
    %v300 = vadd.f32 %v226, %v299
    %v301 = vpop.f32.mrb[0].mxu0
    %302 = vmatprep.mubr.f32.mxu0 0.0
    %303 = vmatmul.mubr.f32.gmra.mrb[0].mxu0 %v103
    %v304 = vpop.f32.mrb[0].mxu0
    %v305 = vadd.f32 %v226, %v304
    %v306 = vpop.f32.mrb[0].mxu0
    %307 = vmatprep.mubr.f32.mxu0 0.0
    %308 = vmatmul.mubr.f32.gmra.mrb[0].mxu0 %v104
    %v309 = vpop.f32.mrb[0].mxu0
    %v310 = vadd.f32 %v226, %v309
    %v311 = vpop.f32.mrb[0].mxu0
    %312 = vdwg.mxu0
    %v313 = vld [vmem:[#allocation10] sm:$0xff]
    %v314 = vld [vmem:[#allocation10 + $0x8] sm:$0xff]
    %v315 = vld [vmem:[#allocation10 + $0x10] sm:$0xff]
    %v316 = vld [vmem:[#allocation10 + $0x18] sm:$0xff]
    %v317 = vld [vmem:[#allocation10 + $0x20] sm:$0xff]
    %v318 = vld [vmem:[#allocation10 + $0x28] sm:$0xff]
    %v319 = vld [vmem:[#allocation10 + $0x30] sm:$0xff]
    %v320 = vld [vmem:[#allocation10 + $0x38] sm:$0xff]
    %v321 = vld [vmem:[#allocation10 + $0x40] sm:$0xff]
    %v322 = vld [vmem:[#allocation10 + $0x48] sm:$0xff]
    %v323 = vld [vmem:[#allocation10 + $0x50] sm:$0xff]
    %v324 = vld [vmem:[#allocation10 + $0x58] sm:$0xff]
    %v325 = vld [vmem:[#allocation10 + $0x60] sm:$0xff]
    %v326 = vld [vmem:[#allocation10 + $0x68] sm:$0xff]
    %v327 = vld [vmem:[#allocation10 + $0x70] sm:$0xff]
    %v328 = vld [vmem:[#allocation10 + $0x78] sm:$0xff]
    %v329 = vld [vmem:[%s8] sm:$0x1]
    %v331 = vlaneseq
    %v332 = vshrl.u32 %v331, 7
    %v333 = vsub.s32 0, %v332
    %v334 = vrot.slane %v329, %v333
    %336 = vmatprep.subr.mxu0 0.0
    %337 = vmatpush1.msra.mxu0 %v313
    %338 = vmatprep.subr.mxu0 0.0
    %339 = vmatpush1.msra.mxu0 %v314
    %340 = vmatprep.subr.mxu0 0.0
    %341 = vmatpush1.msra.mxu0 %v315
    %342 = vmatprep.subr.mxu0 0.0
    %343 = vmatpush1.msra.mxu0 %v316
    %344 = vmatprep.subr.mxu0 0.0
    %345 = vmatpush1.msra.mxu0 %v317
    %346 = vmatprep.subr.mxu0 0.0
    %347 = vmatpush1.msra.mxu0 %v318
    %348 = vmatprep.subr.mxu0 0.0
    %349 = vmatpush1.msra.mxu0 %v319
    %350 = vmatprep.subr.mxu0 0.0
    %351 = vmatpush1.msra.mxu0 %v320
    %352 = vmatprep.subr.mxu0 0.0
    %353 = vmatpush1.msra.mxu0 %v321
    %354 = vmatprep.subr.mxu0 0.0
    %355 = vmatpush1.msra.mxu0 %v322
    %356 = vmatprep.subr.mxu0 0.0
    %357 = vmatpush1.msra.mxu0 %v323
    %358 = vmatprep.subr.mxu0 0.0
    %359 = vmatpush1.msra.mxu0 %v324
    %360 = vmatprep.subr.mxu0 0.0
    %361 = vmatpush1.msra.mxu0 %v325
    %362 = vmatprep.subr.mxu0 0.0
    %363 = vmatpush1.msra.mxu0 %v326
    %364 = vmatprep.subr.mxu0 0.0
    %365 = vmatpush1.msra.mxu0 %v327
    %366 = vmatprep.subr.mxu0 0.0
    %367 = vmatpush1.msra.mxu0 %v328
    %368 = vmatprep.subr.mxu0 0.0
    %369 = vmatpush1.msra.mxu0 0.0
    %370 = vmatprep.subr.mxu0 0.0
    %371 = vmatpush1.msra.mxu0 0.0
    %372 = vmatprep.subr.mxu0 0.0
    %373 = vmatpush1.msra.mxu0 0.0
    %374 = vmatprep.subr.mxu0 0.0
    %375 = vmatpush1.msra.mxu0 0.0
    %376 = vmatprep.subr.mxu0 0.0
    %377 = vmatpush1.msra.mxu0 0.0
    %378 = vmatprep.subr.mxu0 0.0
    %379 = vmatpush1.msra.mxu0 0.0
    %380 = vmatprep.subr.mxu0 0.0
    %381 = vmatpush1.msra.mxu0 0.0
    %382 = vmatprep.subr.mxu0 0.0
    %383 = vmatpush1.msra.mxu0 0.0
    %384 = vmatprep.subr.mxu0 0.0
    %385 = vmatpush1.msra.mxu0 0.0
    %386 = vmatprep.subr.mxu0 0.0
    %387 = vmatpush1.msra.mxu0 0.0
    %388 = vmatprep.subr.mxu0 0.0
    %389 = vmatpush1.msra.mxu0 0.0
    %390 = vmatprep.subr.mxu0 0.0
    %391 = vmatpush1.msra.mxu0 0.0
    %392 = vmatprep.subr.mxu0 0.0
    %393 = vmatpush1.msra.mxu0 0.0
    %394 = vmatprep.subr.mxu0 0.0
    %395 = vmatpush1.msra.mxu0 0.0
    %396 = vmatprep.subr.mxu0 0.0
    %397 = vmatpush1.msra.mxu0 0.0
    %398 = vmatprep.subr.mxu0 0.0
    %399 = vmatpush1.msra.mxu0 0.0
    %400 = vmatprep.mubr.f32.mxu0 0.0
    %401 = vmatmul.mubr.f32.gmra.mrb[0].mxu0 %v101
    %v402 = vpop.f32.mrb[0].mxu0
    %v403 = vadd.f32 %v334, %v402
    %v404 = vpop.f32.mrb[0].mxu0
    %405 = vmatprep.mubr.f32.mxu0 0.0
    %406 = vmatmul.mubr.f32.gmra.mrb[0].mxu0 %v102
    %v407 = vpop.f32.mrb[0].mxu0
    %v408 = vadd.f32 %v334, %v407
    %v409 = vpop.f32.mrb[0].mxu0
    %410 = vmatprep.mubr.f32.mxu0 0.0
    %411 = vmatmul.mubr.f32.gmra.mrb[0].mxu0 %v103
    %v412 = vpop.f32.mrb[0].mxu0
    %v413 = vadd.f32 %v334, %v412
    %v414 = vpop.f32.mrb[0].mxu0
    %415 = vmatprep.mubr.f32.mxu0 0.0
    %416 = vmatmul.mubr.f32.gmra.mrb[0].mxu0 %v104
    %v417 = vpop.f32.mrb[0].mxu0
    %v418 = vadd.f32 %v334, %v417
    %v419 = vpop.f32.mrb[0].mxu0
    %420 = vdwg.mxu0
    %v421 = vld [vmem:[%s2] sm:$0x1]
    %v422 = vld [vmem:[%s2 + $0x1] sm:$0x1]
    %v425 = vlaneseq
    %v426 = vshrl.u32 %v425, 7
    %v427 = vsub.s32 0, %v426
    %v428 = vrot.slane %v421, %v427
    %v429 = vlaneseq
    %v430 = vshrl.u32 %v429, 7
    %v431 = vsub.s32 0, %v430
    %v432 = vrot.slane %v422, %v431
    %435 = vmatprep.subr.mxu0 0.0
    %436 = vmatpush1.xpose.msra.mxu0 %v295
    %437 = vmatprep.subr.mxu0 0.0
    %438 = vmatpush1.xpose.msra.mxu0 %v300
    %439 = vmatprep.subr.mxu0 0.0
    %440 = vmatpush1.xpose.msra.mxu0 0.0
    %441 = vmatprep.subr.mxu0 0.0
    %442 = vmatpush1.xpose.msra.mxu0 0.0
    %443 = vmatprep.subr.mxu0 0.0
    %444 = vmatpush1.xpose.msra.mxu0 0.0
    %445 = vmatprep.subr.mxu0 0.0
    %446 = vmatpush1.xpose.msra.mxu0 0.0
    %447 = vmatprep.subr.mxu0 0.0
    %448 = vmatpush1.xpose.msra.mxu0 0.0
    %449 = vmatprep.subr.mxu0 0.0
    %450 = vmatpush1.xpose.msra.mxu0 0.0
    %451 = vmatprep.subr.mxu0 0.0
    %452 = vmatpush1.xpose.msra.mxu0 0.0
    %453 = vmatprep.subr.mxu0 0.0
    %454 = vmatpush1.xpose.msra.mxu0 0.0
    %455 = vmatprep.subr.mxu0 0.0
    %456 = vmatpush1.xpose.msra.mxu0 0.0
    %457 = vmatprep.subr.mxu0 0.0
    %458 = vmatpush1.xpose.msra.mxu0 0.0
    %459 = vmatprep.subr.mxu0 0.0
    %460 = vmatpush1.xpose.msra.mxu0 0.0
    %461 = vmatprep.subr.mxu0 0.0
    %462 = vmatpush1.xpose.msra.mxu0 0.0
    %463 = vmatprep.subr.mxu0 0.0
    %464 = vmatpush1.xpose.msra.mxu0 0.0
    %465 = vmatprep.subr.mxu0 0.0
    %466 = vmatpush1.xpose.msra.mxu0 0.0
    %467 = vmatprep.subr.mxu0 0.0
    %468 = vmatpush1.xpose.msra.mxu0 0.0
    %469 = vmatprep.subr.mxu0 0.0
    %470 = vmatpush1.xpose.msra.mxu0 0.0
    %471 = vmatprep.subr.mxu0 0.0
    %472 = vmatpush1.xpose.msra.mxu0 0.0
    %473 = vmatprep.subr.mxu0 0.0
    %474 = vmatpush1.xpose.msra.mxu0 0.0
    %475 = vmatprep.subr.mxu0 0.0
    %476 = vmatpush1.xpose.msra.mxu0 0.0
    %477 = vmatprep.subr.mxu0 0.0
    %478 = vmatpush1.xpose.msra.mxu0 0.0
    %479 = vmatprep.subr.mxu0 0.0
    %480 = vmatpush1.xpose.msra.mxu0 0.0
    %481 = vmatprep.subr.mxu0 0.0
    %482 = vmatpush1.xpose.msra.mxu0 0.0
    %483 = vmatprep.subr.mxu0 0.0
    %484 = vmatpush1.xpose.msra.mxu0 0.0
    %485 = vmatprep.subr.mxu0 0.0
    %486 = vmatpush1.xpose.msra.mxu0 0.0
    %487 = vmatprep.subr.mxu0 0.0
    %488 = vmatpush1.xpose.msra.mxu0 0.0
    %489 = vmatprep.subr.mxu0 0.0
    %490 = vmatpush1.xpose.msra.mxu0 0.0
    %491 = vmatprep.subr.mxu0 0.0
    %492 = vmatpush1.xpose.msra.mxu0 0.0
    %493 = vmatprep.subr.mxu0 0.0
    %494 = vmatpush1.xpose.msra.mxu0 0.0
    %495 = vmatprep.subr.mxu0 0.0
    %496 = vmatpush1.xpose.msra.mxu0 0.0
    %497 = vmatprep.subr.mxu0 0.0
    %498 = vmatpush1.xpose.msra.mxu0 0.0
    %499 = vmatprep.mubr.f32.mxu0 0.0
    %500 = vmatmul.mubr.f32.gmra.mrb[0].mxu0 %v197
    %v501 = vpop.f32.mrb[0].mxu0
    %v502 = vadd.f32 %v428, %v501
    %v503 = vpop.f32.mrb[0].mxu0
    %504 = vdwg.mxu0
    %505 = vmatprep.subr.mxu0 0.0
    %506 = vmatpush1.xpose.msra.mxu0 %v305
    %507 = vmatprep.subr.mxu0 0.0
    %508 = vmatpush1.xpose.msra.mxu0 %v310
    %509 = vmatprep.subr.mxu0 0.0
    %510 = vmatpush1.xpose.msra.mxu0 0.0
    %511 = vmatprep.subr.mxu0 0.0
    %512 = vmatpush1.xpose.msra.mxu0 0.0
    %513 = vmatprep.subr.mxu0 0.0
    %514 = vmatpush1.xpose.msra.mxu0 0.0
    %515 = vmatprep.subr.mxu0 0.0
    %516 = vmatpush1.xpose.msra.mxu0 0.0
    %517 = vmatprep.subr.mxu0 0.0
    %518 = vmatpush1.xpose.msra.mxu0 0.0
    %519 = vmatprep.subr.mxu0 0.0
    %520 = vmatpush1.xpose.msra.mxu0 0.0
    %521 = vmatprep.subr.mxu0 0.0
    %522 = vmatpush1.xpose.msra.mxu0 0.0
    %523 = vmatprep.subr.mxu0 0.0
    %524 = vmatpush1.xpose.msra.mxu0 0.0
    %525 = vmatprep.subr.mxu0 0.0
    %526 = vmatpush1.xpose.msra.mxu0 0.0
    %527 = vmatprep.subr.mxu0 0.0
    %528 = vmatpush1.xpose.msra.mxu0 0.0
    %529 = vmatprep.subr.mxu0 0.0
    %530 = vmatpush1.xpose.msra.mxu0 0.0
    %531 = vmatprep.subr.mxu0 0.0
    %532 = vmatpush1.xpose.msra.mxu0 0.0
    %533 = vmatprep.subr.mxu0 0.0
    %534 = vmatpush1.xpose.msra.mxu0 0.0
    %535 = vmatprep.subr.mxu0 0.0
    %536 = vmatpush1.xpose.msra.mxu0 0.0
    %537 = vmatprep.subr.mxu0 0.0
    %538 = vmatpush1.xpose.msra.mxu0 0.0
    %539 = vmatprep.subr.mxu0 0.0
    %540 = vmatpush1.xpose.msra.mxu0 0.0
    %541 = vmatprep.subr.mxu0 0.0
    %542 = vmatpush1.xpose.msra.mxu0 0.0
    %543 = vmatprep.subr.mxu0 0.0
    %544 = vmatpush1.xpose.msra.mxu0 0.0
    %545 = vmatprep.subr.mxu0 0.0
    %546 = vmatpush1.xpose.msra.mxu0 0.0
    %547 = vmatprep.subr.mxu0 0.0
    %548 = vmatpush1.xpose.msra.mxu0 0.0
    %549 = vmatprep.subr.mxu0 0.0
    %550 = vmatpush1.xpose.msra.mxu0 0.0
    %551 = vmatprep.subr.mxu0 0.0
    %552 = vmatpush1.xpose.msra.mxu0 0.0
    %553 = vmatprep.subr.mxu0 0.0
    %554 = vmatpush1.xpose.msra.mxu0 0.0
    %555 = vmatprep.subr.mxu0 0.0
    %556 = vmatpush1.xpose.msra.mxu0 0.0
    %557 = vmatprep.subr.mxu0 0.0
    %558 = vmatpush1.xpose.msra.mxu0 0.0
    %559 = vmatprep.subr.mxu0 0.0
    %560 = vmatpush1.xpose.msra.mxu0 0.0
    %561 = vmatprep.subr.mxu0 0.0
    %562 = vmatpush1.xpose.msra.mxu0 0.0
    %563 = vmatprep.subr.mxu0 0.0
    %564 = vmatpush1.xpose.msra.mxu0 0.0
    %565 = vmatprep.subr.mxu0 0.0
    %566 = vmatpush1.xpose.msra.mxu0 0.0
    %567 = vmatprep.subr.mxu0 0.0
    %568 = vmatpush1.xpose.msra.mxu0 0.0
    %569 = vmatprep.mubr.f32.mxu0 0.0
    %570 = vmatmul.mubr.f32.gmra.mrb[0].mxu0 %v202
    %v571 = vpop.f32.mrb[0].mxu0
    %v572 = vadd.f32 %v432, %v571
    %v573 = vpop.f32.mrb[0].mxu0
    %574 = vdwg.mxu0
    %vm575 = vcmask 130048
    %v576 = vsel %vm575, %v502, -inf
    %577 = vmax.xlane.f32.xlu0 %v576
    %v578 = vpop.xlane.xlu0 %577
    %v579 = vsel %vm575, %v572, -inf
    %580 = vmax.xlane.f32.xlu0 %v579
    %v581 = vpop.xlane.xlu0 %580
    %v582 = vsub.f32 %v502, %v578
    %v583 = vsub.f32 %v572, %v581
    %v584 = vmul.f32 %v582, 1.442695
    %v585 = vpow.pop %v584
    %v586 = vmul.f32 %v583, 1.442695
    %v587 = vpow.pop %v586
    %v588 = vsel %vm575, %v585, 0.0
    %589 = vadd.xlane.f32.xlu0 %v588
    %v590 = vpop.xlane.xlu0 %589
    %v591 = vsel %vm575, %v587, 0.0
    %592 = vadd.xlane.f32.xlu0 %v591
    %v593 = vpop.xlane.xlu0 %592
    %v594 = vrcp.pop %v590
    %v595 = vrcp.pop %v593
    %v596 = vmul.f32 %v585, %v594
    %v597 = vmul.f32 %v587, %v595
    %v599 = vsel %vm575, %v596, 0
    %601 = vmatprep.subr.mxu0 0.0
    %602 = vmatpush1.msra.mxu0 %v403
    %603 = vmatprep.subr.mxu0 0.0
    %604 = vmatpush1.msra.mxu0 %v408
    %605 = vmatprep.subr.mxu0 0.0
    %606 = vmatpush1.msra.mxu0 0.0
    %607 = vmatprep.subr.mxu0 0.0
    %608 = vmatpush1.msra.mxu0 0.0
    %609 = vmatprep.subr.mxu0 0.0
    %610 = vmatpush1.msra.mxu0 0.0
    %611 = vmatprep.subr.mxu0 0.0
    %612 = vmatpush1.msra.mxu0 0.0
    %613 = vmatprep.subr.mxu0 0.0
    %614 = vmatpush1.msra.mxu0 0.0
    %615 = vmatprep.subr.mxu0 0.0
    %616 = vmatpush1.msra.mxu0 0.0
    %617 = vmatprep.subr.mxu0 0.0
    %618 = vmatpush1.msra.mxu0 0.0
    %619 = vmatprep.subr.mxu0 0.0
    %620 = vmatpush1.msra.mxu0 0.0
    %621 = vmatprep.subr.mxu0 0.0
    %622 = vmatpush1.msra.mxu0 0.0
    %623 = vmatprep.subr.mxu0 0.0
    %624 = vmatpush1.msra.mxu0 0.0
    %625 = vmatprep.subr.mxu0 0.0
    %626 = vmatpush1.msra.mxu0 0.0
    %627 = vmatprep.subr.mxu0 0.0
    %628 = vmatpush1.msra.mxu0 0.0
    %629 = vmatprep.subr.mxu0 0.0
    %630 = vmatpush1.msra.mxu0 0.0
    %631 = vmatprep.subr.mxu0 0.0
    %632 = vmatpush1.msra.mxu0 0.0
    %633 = vmatprep.subr.mxu0 0.0
    %634 = vmatpush1.msra.mxu0 0.0
    %635 = vmatprep.subr.mxu0 0.0
    %636 = vmatpush1.msra.mxu0 0.0
    %637 = vmatprep.subr.mxu0 0.0
    %638 = vmatpush1.msra.mxu0 0.0
    %639 = vmatprep.subr.mxu0 0.0
    %640 = vmatpush1.msra.mxu0 0.0
    %641 = vmatprep.subr.mxu0 0.0
    %642 = vmatpush1.msra.mxu0 0.0
    %643 = vmatprep.subr.mxu0 0.0
    %644 = vmatpush1.msra.mxu0 0.0
    %645 = vmatprep.subr.mxu0 0.0
    %646 = vmatpush1.msra.mxu0 0.0
    %647 = vmatprep.subr.mxu0 0.0
    %648 = vmatpush1.msra.mxu0 0.0
    %649 = vmatprep.subr.mxu0 0.0
    %650 = vmatpush1.msra.mxu0 0.0
    %651 = vmatprep.subr.mxu0 0.0
    %652 = vmatpush1.msra.mxu0 0.0
    %653 = vmatprep.subr.mxu0 0.0
    %654 = vmatpush1.msra.mxu0 0.0
    %655 = vmatprep.subr.mxu0 0.0
    %656 = vmatpush1.msra.mxu0 0.0
    %657 = vmatprep.subr.mxu0 0.0
    %658 = vmatpush1.msra.mxu0 0.0
    %659 = vmatprep.subr.mxu0 0.0
    %660 = vmatpush1.msra.mxu0 0.0
    %661 = vmatprep.subr.mxu0 0.0
    %662 = vmatpush1.msra.mxu0 0.0
    %663 = vmatprep.subr.mxu0 0.0
    %664 = vmatpush1.msra.mxu0 0.0
    %665 = vmatprep.mubr.f32.mxu0 0.0
    %666 = vmatmul.mubr.f32.gmra.mrb[0].mxu0 %v599
    %v667 = vpop.f32.mrb[0].mxu0
    %v668 = vadd.f32 0.0, %v667
    %v669 = vpop.f32.mrb[0].mxu0
    %670 = vdwg.mxu0
    %v672 = vsel %vm575, %v597, 0
    %674 = vmatprep.subr.mxu0 0.0
    %675 = vmatpush1.msra.mxu0 %v413
    %676 = vmatprep.subr.mxu0 0.0
    %677 = vmatpush1.msra.mxu0 %v418
    %678 = vmatprep.subr.mxu0 0.0
    %679 = vmatpush1.msra.mxu0 0.0
    %680 = vmatprep.subr.mxu0 0.0
    %681 = vmatpush1.msra.mxu0 0.0
    %682 = vmatprep.subr.mxu0 0.0
    %683 = vmatpush1.msra.mxu0 0.0
    %684 = vmatprep.subr.mxu0 0.0
    %685 = vmatpush1.msra.mxu0 0.0
    %686 = vmatprep.subr.mxu0 0.0
    %687 = vmatpush1.msra.mxu0 0.0
    %688 = vmatprep.subr.mxu0 0.0
    %689 = vmatpush1.msra.mxu0 0.0
    %690 = vmatprep.subr.mxu0 0.0
    %691 = vmatpush1.msra.mxu0 0.0
    %692 = vmatprep.subr.mxu0 0.0
    %693 = vmatpush1.msra.mxu0 0.0
    %694 = vmatprep.subr.mxu0 0.0
    %695 = vmatpush1.msra.mxu0 0.0
    %696 = vmatprep.subr.mxu0 0.0
    %697 = vmatpush1.msra.mxu0 0.0
    %698 = vmatprep.subr.mxu0 0.0
    %699 = vmatpush1.msra.mxu0 0.0
    %700 = vmatprep.subr.mxu0 0.0
    %701 = vmatpush1.msra.mxu0 0.0
    %702 = vmatprep.subr.mxu0 0.0
    %703 = vmatpush1.msra.mxu0 0.0
    %704 = vmatprep.subr.mxu0 0.0
    %705 = vmatpush1.msra.mxu0 0.0
    %706 = vmatprep.subr.mxu0 0.0
    %707 = vmatpush1.msra.mxu0 0.0
    %708 = vmatprep.subr.mxu0 0.0
    %709 = vmatpush1.msra.mxu0 0.0
    %710 = vmatprep.subr.mxu0 0.0
    %711 = vmatpush1.msra.mxu0 0.0
    %712 = vmatprep.subr.mxu0 0.0
    %713 = vmatpush1.msra.mxu0 0.0
    %714 = vmatprep.subr.mxu0 0.0
    %715 = vmatpush1.msra.mxu0 0.0
    %716 = vmatprep.subr.mxu0 0.0
    %717 = vmatpush1.msra.mxu0 0.0
    %718 = vmatprep.subr.mxu0 0.0
    %719 = vmatpush1.msra.mxu0 0.0
    %720 = vmatprep.subr.mxu0 0.0
    %721 = vmatpush1.msra.mxu0 0.0
    %722 = vmatprep.subr.mxu0 0.0
    %723 = vmatpush1.msra.mxu0 0.0
    %724 = vmatprep.subr.mxu0 0.0
    %725 = vmatpush1.msra.mxu0 0.0
    %726 = vmatprep.subr.mxu0 0.0
    %727 = vmatpush1.msra.mxu0 0.0
    %728 = vmatprep.subr.mxu0 0.0
    %729 = vmatpush1.msra.mxu0 0.0
    %730 = vmatprep.subr.mxu0 0.0
    %731 = vmatpush1.msra.mxu0 0.0
    %732 = vmatprep.subr.mxu0 0.0
    %733 = vmatpush1.msra.mxu0 0.0
    %734 = vmatprep.subr.mxu0 0.0
    %735 = vmatpush1.msra.mxu0 0.0
    %736 = vmatprep.subr.mxu0 0.0
    %737 = vmatpush1.msra.mxu0 0.0
    %738 = vmatprep.mubr.f32.mxu0 0.0
    %739 = vmatmul.mubr.f32.gmra.mrb[0].mxu0 %v672
    %v740 = vpop.f32.mrb[0].mxu0
    %v741 = vadd.f32 0.0, %v740
    %v742 = vpop.f32.mrb[0].mxu0
    %743 = vdwg.mxu0
    %744 = vst [vmem:[#allocation11] sm:$0xff] %v668
    %745 = vst [vmem:[#allocation11 + $0x8] sm:$0xff] %v741
    // Predicated region
    $region58: #{tpu_custom_call.1} parent=1 // pred_check
      _
    $region59: #{tpu_custom_call.1} parent=1 // pred_check_branch
      %747 = sbr.rel (0) target = $region61
    $region60: #{tpu_custom_call.1} parent=1 // pred_region
      %s749 = ssub.s32 256, 256
      %750 = vsyncadd [#allocation4], %s749
      %s751 = sshll.u32 [#allocation11], 4
      %s752 = int_to_ptr.vmem [resolvable:$true] %s751
      %757 = dma.vmem_to_hbm [thread:$0]  %s752, 256, %s9, [#allocation4], 128, 128, 8
    $region61: #{tpu_custom_call.1} parent=1 // pred_fallthru
      _
    // Predicated region
    $region62: #{tpu_custom_call.1} parent=1 // pred_check
      _
    $region63: #{tpu_custom_call.1} parent=1 // pred_check_branch
      %759 = sbr.rel (0) target = $region65
    $region64: #{tpu_custom_call.1} parent=1 // pred_region
      %760 = dma.done [#allocation4], 256
    $region65: #{tpu_custom_call.1} parent=1 // pred_fallthru
      _
    %761 = vsyncpa [#allocation3], 1
    %762 = vsyncpa [#allocation6], 1
    %763 = vsyncpa [#allocation9], 1
    %764 = vsyncpa [#allocation4], 1

</llo_original>
